<compile_context>
chip_gen: v7x
topology: tpu7x:2x2x1
jax: 0.10.0
libtpu: 0.0.40
codegen_flags: <defaults>
</compile_context>

<pallas_src>
import functools

import jax
import jax.numpy as jnp
from jax.experimental import pallas as pl
from jax.experimental.pallas import tpu as pltpu

CHANNEL = 8            # module channel (multiple of 8 so 2*c % 16 == 0)
DEFORM_GROUPS = 16
MAX_RESIDUE_MAGNITUDE = 10.0
# Safe across v5e/v6e (128 MiB physical) and v7x (64 MiB/TC); raise toward ~100 MiB on
# v5e/v6e only if whole-frame blocks stop fitting at larger H*W.
VMEM_LIMIT_BYTES = 48 * 1024 * 1024


# --------------------------------------------------------------------------
# In-kernel helpers (operate on VMEM values at trace time)
# --------------------------------------------------------------------------
def _pad_hw(x):
    """Zero-pad an (H, W, C) VMEM value by 1 on both spatial dims (no HBM traffic)."""
    H, W, C = x.shape
    zrow = jnp.zeros((1, W, C), x.dtype)
    x = jnp.concatenate([zrow, x, zrow], axis=0)
    zcol = jnp.zeros((H + 2, 1, C), x.dtype)
    return jnp.concatenate([zcol, x, zcol], axis=1)


def _im2col_patches(x):
    """(H, W, Cin) -> (H*W, 9*Cin) bf16 patches, column order (kh, kw, ic)."""
    H, W, Cin = x.shape
    xp = _pad_hw(x.astype(jnp.bfloat16))
    cols = [xp[kh:kh + H, kw:kw + W, :].reshape(H * W, Cin)
            for kh in range(3) for kw in range(3)]
    return jnp.concatenate(cols, axis=-1)


def _conv3x3(x, w_flat, b, *, leaky):
    """3x3 conv (stride 1, pad 1) as a single deep-K MXU matmul.

    x:      (H, W, Cin)  value resident in VMEM
    w_flat: (9*Cin, Cout) bf16, row ordering (kh, kw, ic)
    b:      (1, Cout)    f32
    """
    H, W, _ = x.shape
    y = jnp.dot(_im2col_patches(x), w_flat, preferred_element_type=jnp.float32) + b
    if leaky:                                                    # LeakyReLU(0.1)
        y = jnp.where(y >= 0.0, y, 0.1 * y)
    return y.reshape(H, W, -1)


# --------------------------------------------------------------------------
# Pallas kernels
# --------------------------------------------------------------------------
def _conv_offset_kernel(c1_ref, fc_ref, c2_ref, f1_ref, f2_ref,
                        w0_ref, b0_ref, w1_ref, b1_ref, w2_ref, b2_ref,
                        w3o1_ref, b3o1_ref, w3o2_ref, b3o2_ref, w3m_ref, b3m_ref,
                        off1_ref, off2_ref, mask_ref, *, H, W, dg, mag):
    """Fused conv_offset stack (4 convs) + offset/mask epilogue, all in VMEM."""
    f1 = f1_ref[0].astype(jnp.float32)
    f2 = f2_ref[0].astype(jnp.float32)
    ef = jnp.concatenate([c1_ref[0].astype(jnp.float32),
                          fc_ref[0].astype(jnp.float32),
                          c2_ref[0].astype(jnp.float32),
                          f1, f2], axis=-1)                      # (H, W, 3c+4)

    y = _conv3x3(ef, w0_ref[...], b0_ref[...].astype(jnp.float32), leaky=True)
    y = _conv3x3(y, w1_ref[...], b1_ref[...].astype(jnp.float32), leaky=True)
    y = _conv3x3(y, w2_ref[...], b2_ref[...].astype(jnp.float32), leaky=True)

    # Last conv split into 3 column blocks (o1 / o2 / mask): patches built once, no
    # misaligned 144-channel slicing/concat of a 432-wide value.
    yp = _im2col_patches(y)                                      # (H*W, 9c) bf16
    C9 = 9 * dg
    o1 = (jnp.dot(yp, w3o1_ref[...], preferred_element_type=jnp.float32)
          + b3o1_ref[...].astype(jnp.float32)).reshape(H, W, C9)
    o2 = (jnp.dot(yp, w3o2_ref[...], preferred_element_type=jnp.float32)
          + b3o2_ref[...].astype(jnp.float32)).reshape(H, W, C9)
    m = (jnp.dot(yp, w3m_ref[...], preferred_element_type=jnp.float32)
         + b3m_ref[...].astype(jnp.float32)).reshape(H, W, C9)

    # flow.flip(1).repeat(1, C9//2, 1, 1) built in-register: channel pattern [fy, fx, ...]
    lane = jax.lax.broadcasted_iota(jnp.int32, (H, W, C9), 2)
    even = (lane % 2) == 0

    def tiled_flip(f):
        fy = jnp.broadcast_to(f[..., 1:2], (H, W, C9))
        fx = jnp.broadcast_to(f[..., 0:1], (H, W, C9))
        return jnp.where(even, fy, fx)

    off1_ref[0] = (mag * jnp.tanh(o1) + tiled_flip(f1)).astype(off1_ref.dtype)
    off2_ref[0] = (mag * jnp.tanh(o2) + tiled_flip(f2)).astype(off2_ref.dtype)
    mask_ref[0] = jax.nn.sigmoid(m).astype(mask_ref.dtype)       # bf16 intermediate


@functools.lru_cache(maxsize=None)
def _build_conv_offset(B, H, W, c, dg, mag):
    C0 = 3 * c + 4
    C9 = 9 * dg
    kern = functools.partial(_conv_offset_kernel, H=H, W=W, dg=dg, mag=mag)

    def dspec(C):
        return pl.BlockSpec((1, H, W, C), lambda i: (i, 0, 0, 0))

    def wspec(K, N):
        return pl.BlockSpec((K, N), lambda i: (0, 0))

    fn = pl.pallas_call(
        kern,
        out_shape=(jax.ShapeDtypeStruct((B, H, W, C9), jnp.float32),   # offsets stay f32
                   jax.ShapeDtypeStruct((B, H, W, C9), jnp.float32),
                   jax.ShapeDtypeStruct((B, H, W, C9), jnp.bfloat16)),  # mask in bf16
        grid=(B,),
        in_specs=[dspec(c), dspec(c), dspec(c), dspec(2), dspec(2),
                  wspec(9 * C0, c), wspec(1, c),
                  wspec(9 * c, c), wspec(1, c),
                  wspec(9 * c, c), wspec(1, c),
                  wspec(9 * c, C9), wspec(1, C9),
                  wspec(9 * c, C9), wspec(1, C9),
                  wspec(9 * c, C9), wspec(1, C9)],
        out_specs=[pl.BlockSpec((1, H, W, C9), lambda i: (i, 0, 0, 0)),
                   pl.BlockSpec((1, H, W, C9), lambda i: (i, 0, 0, 0)),
                   pl.BlockSpec((1, H, W, C9), lambda i: (i, 0, 0, 0))],
        compiler_params=pltpu.CompilerParams(
            dimension_semantics=("parallel",),
            vmem_limit_bytes=VMEM_LIMIT_BYTES),
    )
    return jax.jit(fn)


def fused_conv_offset(cond_n1, feat_current, cond_n2, flow_1, flow_2, p):
    B, H, W, c = feat_current.shape
    fn = _build_conv_offset(B, H, W, c, DEFORM_GROUPS, float(MAX_RESIDUE_MAGNITUDE))
    return fn(cond_n1, feat_current, cond_n2, flow_1, flow_2,
              p['off_w0'], p['off_b0'], p['off_w1'], p['off_b1'],
              p['off_w2'], p['off_b2'],
              p['off_w3_o1'], p['off_b3_o1'],
              p['off_w3_o2'], p['off_b3_o2'],
              p['off_w3_m'], p['off_b3_m'])


def _dcn_backbone_kernel(*refs, H, W, c, K, n_extra):
    """Fused DCN 1-matmul + backbone (concat -> conv3x3+LeakyReLU -> conv3x3 -> +res).

    The deform-aligned feature stays in VMEM; only the final (H,W,c) result hits HBM.
    """
    cols_ref = refs[0]
    extras = [refs[1 + i][0].astype(jnp.float32) for i in range(n_extra)]
    dcn_w_ref, dcn_b_ref, w0_ref, b0_ref, w1_ref, b1_ref = refs[1 + n_extra:7 + n_extra]
    o_ref = refs[7 + n_extra]

    cols = cols_ref[0].reshape(H * W, K)                          # bf16 im2col columns
    y = jnp.dot(cols, dcn_w_ref[...], preferred_element_type=jnp.float32)
    feat_dcn = (y + dcn_b_ref[...].astype(jnp.float32)).reshape(H, W, c)

    x = jnp.concatenate(extras + [feat_dcn], axis=-1)
    h1 = _conv3x3(x, w0_ref[...], b0_ref[...].astype(jnp.float32), leaky=True)
    h2 = _conv3x3(h1, w1_ref[...], b1_ref[...].astype(jnp.float32), leaky=False)
    o_ref[0] = (feat_dcn + h2).astype(o_ref.dtype)


@functools.lru_cache(maxsize=None)
def _build_dcn_backbone(B, H, W, c, K, n_extra):
    Cin_bb = (n_extra + 1) * c
    kern = functools.partial(_dcn_backbone_kernel, H=H, W=W, c=c, K=K, n_extra=n_extra)
    in_specs = ([pl.BlockSpec((1, H, W, K), lambda i: (i, 0, 0, 0))]
                + [pl.BlockSpec((1, H, W, c), lambda i: (i, 0, 0, 0)) for _ in range(n_extra)]
                + [pl.BlockSpec((K, c), lambda i: (0, 0)),
                   pl.BlockSpec((1, c), lambda i: (0, 0)),
                   pl.BlockSpec((9 * Cin_bb, c), lambda i: (0, 0)),
                   pl.BlockSpec((1, c), lambda i: (0, 0)),
                   pl.BlockSpec((9 * c, c), lambda i: (0, 0)),
                   pl.BlockSpec((1, c), lambda i: (0, 0))])
    fn = pl.pallas_call(
        kern,
        out_shape=jax.ShapeDtypeStruct((B, H, W, c), jnp.float32),
        grid=(B,),
        in_specs=in_specs,
        out_specs=pl.BlockSpec((1, H, W, c), lambda i: (i, 0, 0, 0)),
        compiler_params=pltpu.CompilerParams(
            dimension_semantics=("parallel",),
            vmem_limit_bytes=VMEM_LIMIT_BYTES),
    )
    return jax.jit(fn)


def fused_dcn_backbone(cols, extras, da_p, bb_p):
    B, H, W, K = cols.shape
    c = extras[0].shape[-1]
    fn = _build_dcn_backbone(B, H, W, c, K, len(extras))
    return fn(cols, *extras, da_p['dcn_w'], da_p['dcn_b'],
              bb_p['w0'], bb_p['b0'], bb_p['w1'], bb_p['b1'])


def _backbone_kernel(*refs, H, W, n_feat):
    """Backbone only (used for the first frame of each direction, feat_prop == 0)."""
    feats = [refs[i][0].astype(jnp.float32) for i in range(n_feat)]
    w0_ref, b0_ref, w1_ref, b1_ref = refs[n_feat:n_feat + 4]
    o_ref = refs[n_feat + 4]
    x = jnp.concatenate(feats, axis=-1)
    y = _conv3x3(x, w0_ref[...], b0_ref[...].astype(jnp.float32), leaky=True)
    y = _conv3x3(y, w1_ref[...], b1_ref[...].astype(jnp.float32), leaky=False)
    o_ref[0] = (feats[-1] + y).astype(o_ref.dtype)                # residual = feat_prop


@functools.lru_cache(maxsize=None)
def _build_backbone(B, H, W, c, n_feat):
    Cin = n_feat * c
    kern = functools.partial(_backbone_kernel, H=H, W=W, n_feat=n_feat)
    in_specs = ([pl.BlockSpec((1, H, W, c), lambda i: (i, 0, 0, 0)) for _ in range(n_feat)]
                + [pl.BlockSpec((9 * Cin, c), lambda i: (0, 0)),
                   pl.BlockSpec((1, c), lambda i: (0, 0)),
                   pl.BlockSpec((9 * c, c), lambda i: (0, 0)),
                   pl.BlockSpec((1, c), lambda i: (0, 0))])
    fn = pl.pallas_call(
        kern,
        out_shape=jax.ShapeDtypeStruct((B, H, W, c), jnp.float32),
        grid=(B,),
        in_specs=in_specs,
        out_specs=pl.BlockSpec((1, H, W, c), lambda i: (i, 0, 0, 0)),
        compiler_params=pltpu.CompilerParams(
            dimension_semantics=("parallel",),
            vmem_limit_bytes=VMEM_LIMIT_BYTES),
    )
    return jax.jit(fn)


def fused_backbone(feat_list, p):
    B, H, W, c = feat_list[0].shape
    fn = _build_backbone(B, H, W, c, len(feat_list))
    return fn(*feat_list, p['w0'], p['b0'], p['w1'], p['b1'])


def _fusion_kernel(xb_ref, xf_ref, wb_ref, wf_ref, b_ref, o_ref, *, H, W, c):
    """Batched 1x1 fusion conv producing a lane-dense (c, H*W) tile directly.

    Two dot_generals against the pre-split weight halves: no 8-lane input concat and no
    (H*W, 8) -> (8, H*W) XLU transpose in the epilogue.
    """
    xb = xb_ref[0].astype(jnp.bfloat16).reshape(H * W, c)
    xf = xf_ref[0].astype(jnp.bfloat16).reshape(H * W, c)
    dn = (((0,), (1,)), ((), ()))                                 # contract Cin
    y = (jax.lax.dot_general(wb_ref[...], xb, dn, preferred_element_type=jnp.float32)
         + jax.lax.dot_general(wf_ref[...], xf, dn, preferred_element_type=jnp.float32)
         + b_ref[...].astype(jnp.float32))                        # (c, H*W)
    o_ref[0] = y.astype(o_ref.dtype)


@functools.lru_cache(maxsize=None)
def _build_fusion(TB, H, W, c):
    kern = functools.partial(_fusion_kernel, H=H, W=W, c=c)
    fn = pl.pallas_call(
        kern,
        out_shape=jax.ShapeDtypeStruct((TB, c, H * W), jnp.float32),
        grid=(TB,),
        in_specs=[pl.BlockSpec((1, H, W, c), lambda i: (i, 0, 0, 0)),
                  pl.BlockSpec((1, H, W, c), lambda i: (i, 0, 0, 0)),
                  pl.BlockSpec((c, c), lambda i: (0, 0)),
                  pl.BlockSpec((c, c), lambda i: (0, 0)),
                  pl.BlockSpec((c, 1), lambda i: (0, 0))],
        out_specs=pl.BlockSpec((1, c, H * W), lambda i: (i, 0, 0)),
        compiler_params=pltpu.CompilerParams(
            dimension_semantics=("parallel",),
            vmem_limit_bytes=VMEM_LIMIT_BYTES),
    )
    return jax.jit(fn)


def fusion_1x1(feat_b, feat_f, wb, wf, b):
    TB, H, W, c = feat_b.shape
    return _build_fusion(TB, H, W, c)(feat_b, feat_f, wb, wf, b)


# --------------------------------------------------------------------------
# JAX glue: bilinear sampling (flow_warp / deformable sampling)
# --------------------------------------------------------------------------
def _bilinear_sample_zeros(img, sx, sy):
    # img: (B,H,W,C); sx,sy: (B,H,W) absolute pixel coords. zeros padding,
    # matches F.grid_sample(mode='bilinear', padding_mode='zeros', align_corners=True).
    B, H, W, C = img.shape
    x0 = jnp.floor(sx)
    y0 = jnp.floor(sy)
    x1 = x0 + 1.0
    y1 = y0 + 1.0
    wx1 = sx - x0
    wx0 = 1.0 - wx1
    wy1 = sy - y0
    wy0 = 1.0 - wy1
    bidx = jnp.arange(B)[:, None, None]

    def corner(yc, xc):
        valid = (xc >= 0) & (xc <= W - 1) & (yc >= 0) & (yc <= H - 1)
        xi = jnp.clip(xc, 0, W - 1).astype(jnp.int32)
        yi = jnp.clip(yc, 0, H - 1).astype(jnp.int32)
        v = img[bidx, yi, xi]
        return v * valid[..., None].astype(img.dtype)

    return ((wy0 * wx0)[..., None] * corner(y0, x0)
            + (wy0 * wx1)[..., None] * corner(y0, x1)
            + (wy1 * wx0)[..., None] * corner(y1, x0)
            + (wy1 * wx1)[..., None] * corner(y1, x1))


def flow_warp(x, flow):
    # x: (B,H,W,C); flow: (B,H,W,2) with [...,0]=dx (width), [...,1]=dy (height)
    B, H, W, C = x.shape
    gy, gx = jnp.meshgrid(jnp.arange(H, dtype=jnp.float32),
                          jnp.arange(W, dtype=jnp.float32), indexing='ij')
    sx = gx[None] + flow[..., 0]
    sy = gy[None] + flow[..., 1]
    return _bilinear_sample_zeros(x, sx, sy)


def dcn_sample_columns(x, off1, off2, mask, dg):
    # x: (B,H,W,Cin); off1/off2: (B,H,W, (dg/2)*9*2) mmcv layout (g, k, {dy,dx});
    # mask: (B,H,W, dg*9) (bf16). Returns modulated im2col columns (B,H,W, Cin*9) in bf16,
    # column ordering (ic, kh, kw) to match weight.transpose(2,0,1,3).reshape(Cin*9, Cout).
    # TODO(synk): move this gather into a Pallas kernel so the cols tensor never hits HBM.
    B, H, W, Cin = x.shape
    cpg = Cin // dg
    K = 9
    hg = dg // 2
    off = jnp.concatenate([off1.reshape(B, H, W, hg, K, 2),
                           off2.reshape(B, H, W, hg, K, 2)], axis=3)   # (B,H,W,dg,K,2)
    msk = mask.astype(jnp.float32).reshape(B, H, W, dg, K)
    xg = jnp.transpose(x.reshape(B, H, W, dg, cpg), (0, 3, 1, 2, 4)).reshape(B * dg, H, W, cpg)
    gy, gx = jnp.meshgrid(jnp.arange(H, dtype=jnp.float32),
                          jnp.arange(W, dtype=jnp.float32), indexing='ij')
    per_k = []
    for k in range(K):
        kh, kw = k // 3, k % 3
        dy = jnp.transpose(off[:, :, :, :, k, 0], (0, 3, 1, 2)).reshape(B * dg, H, W)
        dx = jnp.transpose(off[:, :, :, :, k, 1], (0, 3, 1, 2)).reshape(B * dg, H, W)
        sy = gy[None] + (kh - 1) + dy
        sx = gx[None] + (kw - 1) + dx
        v = _bilinear_sample_zeros(xg, sx, sy)                     # (B*dg,H,W,cpg)
        mk = jnp.transpose(msk[:, :, :, :, k], (0, 3, 1, 2)).reshape(B * dg, H, W, 1)
        v = jnp.transpose((v * mk).reshape(B, dg, H, W, cpg), (0, 2, 3, 1, 4)).reshape(B, H, W, Cin)
        per_k.append(v)
    cols = jnp.stack(per_k, axis=-1)                               # (B,H,W,Cin,9)
    # bf16 is exactly what the MXU consumes; halves HBM traffic of the fattest tensor.
    return cols.reshape(B, H, W, Cin * K).astype(jnp.bfloat16)


# --------------------------------------------------------------------------
# Parameter preprocessing (flatten conv weights for im2col, cast MXU operands to bf16)
# --------------------------------------------------------------------------
def prepare_params(params, channel=CHANNEL, dg=DEFORM_GROUPS):
    c = channel
    bf = jnp.bfloat16
    C9 = 9 * dg
    out = {'deform_align': {}, 'backbone': {}, 'fusion': {}}
    for mi, m in enumerate(['backward_', 'forward_']):
        da = params['deform_align'][m]
        w3 = da['off_w3']                                          # (3,3,c,27*dg)
        b3 = da['off_b3']                                          # (27*dg,)
        out['deform_align'][m] = {
            'off_w0': da['off_w0'].reshape(9 * (3 * c + 4), c).astype(bf),
            'off_b0': da['off_b0'].reshape(1, c),
            'off_w1': da['off_w1'].reshape(9 * c, c).astype(bf),
            'off_b1': da['off_b1'].reshape(1, c),
            'off_w2': da['off_w2'].reshape(9 * c, c).astype(bf),
            'off_b2': da['off_b2'].reshape(1, c),
            # last conv pre-split into o1 / o2 / mask output-column blocks
            'off_w3_o1': w3[..., :C9].reshape(9 * c, C9).astype(bf),
            'off_b3_o1': b3[:C9].reshape(1, C9),
            'off_w3_o2': w3[..., C9:2 * C9].reshape(9 * c, C9).astype(bf),
            'off_b3_o2': b3[C9:2 * C9].reshape(1, C9),
            'off_w3_m': w3[..., 2 * C9:].reshape(9 * c, C9).astype(bf),
            'off_b3_m': b3[2 * C9:].reshape(1, C9),
            # HWIO -> (ic, kh, kw, oc) -> (Cin*9, Cout), matching dcn_sample_columns order
            'dcn_w': jnp.transpose(da['dcn_w'], (2, 0, 1, 3)).reshape(2 * c * 9, c).astype(bf),
            'dcn_b': da['dcn_b'].reshape(1, c),
        }
        bb = params['backbone'][m]
        out['backbone'][m] = {
            'w0': bb['w0'].reshape(9 * (2 + mi) * c, c).astype(bf),
            'b0': bb['b0'].reshape(1, c),
            'w1': bb['w1'].reshape(9 * c, c).astype(bf),
            'b1': bb['b1'].reshape(1, c),
        }
    out['fusion'] = {'wb': params['fusion']['w'][:c].astype(bf),   # (c, c): backward half
                     'wf': params['fusion']['w'][c:].astype(bf),   # (c, c): forward half
                     'b': params['fusion']['b'].reshape(c, 1)}
    return out


# --------------------------------------------------------------------------
# Module forward
# --------------------------------------------------------------------------
def bidirectional_propagation(x, flows_backward, flows_forward, params):
    """x: (b,t,c,h,w); flows_*: (b,t-1,2,h,w).  Returns (b,t,c,h,w)."""
    b, t, c, h, w = x.shape
    pp = prepare_params(params)
    xs = jnp.transpose(x, (0, 1, 3, 4, 2))                  # (b,t,h,w,c)
    fb = jnp.transpose(flows_backward, (0, 1, 3, 4, 2))     # (b,t-1,h,w,2)
    ff = jnp.transpose(flows_forward, (0, 1, 3, 4, 2))

    feats = {'spatial': [xs[:, i] for i in range(t)]}
    for module in ['backward_', 'forward_']:
        feats[module] = []
        frame_idx = list(range(t))
        flow_idx = list(range(-1, t - 1))
        mapping_idx = list(range(t)) + list(range(t))[::-1]
        if 'backward' in module:
            frame_idx = frame_idx[::-1]
            flows = fb
        else:
            flows = ff

        da_p = pp['deform_align'][module]
        bb_p = pp['backbone'][module]
        feat_prop = jnp.zeros((b, h, w, c), jnp.float32)
        # TODO(synk): the per-frame recurrence stays as an unrolled Python loop (t small);
        #             lax.scan with a 2-deep carry would shrink the HLO at large t.
        for i, idx in enumerate(frame_idx):
            feat_current = feats['spatial'][mapping_idx[idx]]
            extras = ([feat_current]
                      + [feats[k][idx] for k in feats if k not in ['spatial', module]])
            if i > 0:
                flow_n1 = flows[:, flow_idx[i]]
                cond_n1 = flow_warp(feat_prop, flow_n1)
                feat_n2 = jnp.zeros_like(feat_prop)
                flow_n2 = jnp.zeros_like(flow_n1)
                cond_n2 = jnp.zeros_like(cond_n1)
                if i > 1:
                    feat_n2 = feats[module][-2]
                    flow_n2 = flows[:, flow_idx[i - 1]]
                    flow_n2 = flow_n1 + flow_warp(flow_n2, flow_n1)
                    cond_n2 = flow_warp(feat_n2, flow_n2)
                off1, off2, mask = fused_conv_offset(
                    cond_n1, feat_current, cond_n2, flow_n1, flow_n2, da_p)
                x_cat = jnp.concatenate([feat_prop, feat_n2], axis=-1)       # (B,H,W,2c)
                cols = dcn_sample_columns(x_cat, off1, off2, mask, DEFORM_GROUPS)
                # DCN matmul + backbone (conv/LeakyReLU/conv + residual) in one kernel.
                feat_prop = fused_dcn_backbone(cols, extras, da_p, bb_p)
            else:
                feat_prop = fused_backbone(extras + [feat_prop], bb_p)
            feats[module].append(feat_prop)
        if 'backward' in module:
            feats[module] = feats[module][::-1]

    # Batched 1x1 fusion conv over all t frames in a single pallas_call (lane-dense output).
    feat_b = jnp.stack(feats['backward_'], axis=0).reshape(t * b, h, w, c)
    feat_f = jnp.stack(feats['forward_'], axis=0).reshape(t * b, h, w, c)
    fused = fusion_1x1(feat_b, feat_f, pp['fusion']['wb'], pp['fusion']['wf'],
                       pp['fusion']['b'])                                     # (t*b, c, h*w)
    out = fused.reshape(t, b, c, h, w)
    return jnp.transpose(out, (1, 0, 2, 3, 4)) + x


# --------------------------------------------------------------------------
# Deterministic synthetic parameters (shapes follow the module __init__)
# --------------------------------------------------------------------------
def init_params(key, channel=CHANNEL, dg=DEFORM_GROUPS):
    keys = iter(jax.random.split(key, 64))

    def nrm(shape, scale=0.1):
        return scale * jax.random.normal(next(keys), shape, jnp.float32)

    c = channel
    p = {'deform_align': {}, 'backbone': {}, 'fusion': {}}
    for mi, m in enumerate(['backward_', 'forward_']):
        p['deform_align'][m] = {
            'off_w0': nrm((3, 3, 3 * c + 4, c)), 'off_b0': nrm((c,)),
            'off_w1': nrm((3, 3, c, c)), 'off_b1': nrm((c,)),
            'off_w2': nrm((3, 3, c, c)), 'off_b2': nrm((c,)),
            # NOTE: the real module zero-inits this last layer; small random
            # values here so the tanh/sigmoid/offset path is exercised.
            'off_w3': nrm((3, 3, c, 27 * dg), 0.01), 'off_b3': nrm((27 * dg,), 0.01),
            'dcn_w': nrm((3, 3, 2 * c, c)), 'dcn_b': nrm((c,)),   # HWIO layout
        }
        p['backbone'][m] = {
            'w0': nrm((3, 3, (2 + mi) * c, c)), 'b0': nrm((c,)),
            'w1': nrm((3, 3, c, c)), 'b1': nrm((c,)),
        }
    p['fusion'] = {'w': nrm((2 * c, c)), 'b': nrm((c,))}
    return p


# --------------------------------------------------------------------------
if __name__ == "__main__":
    b, t, c, h, w = 2, 3, CHANNEL, 16, 16
    key = jax.random.PRNGKey(0)
    kx, kfb, kff, kp = jax.random.split(key, 4)
    x = jax.random.normal(kx, (b, t, c, h, w), jnp.float32)
    flows_backward = 2.0 * jax.random.normal(kfb, (b, t - 1, 2, h, w), jnp.float32)
    flows_forward = 2.0 * jax.random.normal(kff, (b, t - 1, 2, h, w), jnp.float32)
    params = init_params(kp)

    fwd = jax.jit(bidirectional_propagation)
    out = fwd(x, flows_backward, flows_forward, params)
    out = jax.block_until_ready(out)
    assert out.shape == (b, t, c, h, w), out.shape
    assert bool(jnp.all(jnp.isfinite(out)))
    print("KERNEL_OK")
</pallas_src>

<mosaic_0001>
module attributes {stable_mosaic.version = 11 : i64} {
  func.func @_backbone_kernel(%arg0: i32, %arg1: memref<1x16x16x8xf32, #tpu.memory_space<vmem>>, %arg2: memref<1x16x16x8xf32, #tpu.memory_space<vmem>>, %arg3: memref<144x8xbf16, #tpu.memory_space<vmem>>, %arg4: memref<1x8xf32, #tpu.memory_space<vmem>>, %arg5: memref<72x8xbf16, #tpu.memory_space<vmem>>, %arg6: memref<1x8xf32, #tpu.memory_space<vmem>>, %arg7: memref<1x16x16x8xf32, #tpu.memory_space<vmem>>) attributes {dimension_semantics = [#tpu.dimension_semantics<parallel>], iteration_bounds = array<i64: 2>, scalar_prefetch = 0 : i64, scratch_operands = 0 : i64, tpu.core_type = #tpu.core_type<tc>, window_params = [{transform_indices = @transform_0, window_bounds = array<i64: 1, 16, 16, 8>}, {transform_indices = @transform_1, window_bounds = array<i64: 1, 16, 16, 8>}, {pipeline_mode = #tpu.pipeline_mode<synchronous>, transform_indices = @transform_2, window_bounds = array<i64: 144, 8>}, {pipeline_mode = #tpu.pipeline_mode<synchronous>, transform_indices = @transform_3, window_bounds = array<i64: 1, 8>}, {pipeline_mode = #tpu.pipeline_mode<synchronous>, transform_indices = @transform_4, window_bounds = array<i64: 72, 8>}, {pipeline_mode = #tpu.pipeline_mode<synchronous>, transform_indices = @transform_5, window_bounds = array<i64: 1, 8>}, {transform_indices = @transform_6, window_bounds = array<i64: 1, 16, 16, 8>}]} {
    %c0 = arith.constant 0 : index
    %c0_0 = arith.constant 0 : index
    %c0_1 = arith.constant 0 : index
    %c0_2 = arith.constant 0 : index
    %0 = vector.load %arg1[%c0, %c0_0, %c0_1, %c0_2] : memref<1x16x16x8xf32, #tpu.memory_space<vmem>>, vector<1x16x16x8xf32>
    %1 = vector.shape_cast %0 : vector<1x16x16x8xf32> to vector<16x16x8xf32>
    %c0_3 = arith.constant 0 : index
    %c0_4 = arith.constant 0 : index
    %c0_5 = arith.constant 0 : index
    %c0_6 = arith.constant 0 : index
    %2 = vector.load %arg2[%c0_3, %c0_4, %c0_5, %c0_6] : memref<1x16x16x8xf32, #tpu.memory_space<vmem>>, vector<1x16x16x8xf32>
    %3 = vector.shape_cast %2 : vector<1x16x16x8xf32> to vector<16x16x8xf32>
    %4 = tpu.concatenate %1, %3 in 2 : vector<16x16x8xf32>, vector<16x16x8xf32> -> vector<16x16x16xf32>
    %c0_7 = arith.constant 0 : index
    %c0_8 = arith.constant 0 : index
    %5 = vector.load %arg3[%c0_7, %c0_8] : memref<144x8xbf16, #tpu.memory_space<vmem>>, vector<144x8xbf16>
    %c0_9 = arith.constant 0 : index
    %c0_10 = arith.constant 0 : index
    %6 = vector.load %arg4[%c0_9, %c0_10] : memref<1x8xf32, #tpu.memory_space<vmem>>, vector<1x8xf32>
    %7 = arith.truncf %4 : vector<16x16x16xf32> to vector<16x16x16xbf16>
    %cst = arith.constant 0.000000e+00 : bf16
    %8 = vector.broadcast %cst : bf16 to vector<1x16x16xbf16>
    %9 = tpu.concatenate %8, %7, %8 in 0 : vector<1x16x16xbf16>, vector<16x16x16xbf16>, vector<1x16x16xbf16> -> vector<18x16x16xbf16>
    %cst_11 = arith.constant 0.000000e+00 : bf16
    %10 = vector.broadcast %cst_11 : bf16 to vector<18x1x16xbf16>
    %11 = tpu.concatenate %10, %9, %10 in 1 : vector<18x1x16xbf16>, vector<18x16x16xbf16>, vector<18x1x16xbf16> -> vector<18x18x16xbf16>
    %12 = vector.extract_strided_slice %11 {offsets = [0, 0, 0], sizes = [16, 16, 16], strides = [1, 1, 1]} : vector<18x18x16xbf16> to vector<16x16x16xbf16>
    %13 = vector.shape_cast %12 : vector<16x16x16xbf16> to vector<256x16xbf16>
    %14 = vector.extract_strided_slice %11 {offsets = [0, 1, 0], sizes = [16, 16, 16], strides = [1, 1, 1]} : vector<18x18x16xbf16> to vector<16x16x16xbf16>
    %15 = vector.shape_cast %14 : vector<16x16x16xbf16> to vector<256x16xbf16>
    %16 = vector.extract_strided_slice %11 {offsets = [0, 2, 0], sizes = [16, 16, 16], strides = [1, 1, 1]} : vector<18x18x16xbf16> to vector<16x16x16xbf16>
    %17 = vector.shape_cast %16 : vector<16x16x16xbf16> to vector<256x16xbf16>
    %18 = vector.extract_strided_slice %11 {offsets = [1, 0, 0], sizes = [16, 16, 16], strides = [1, 1, 1]} : vector<18x18x16xbf16> to vector<16x16x16xbf16>
    %19 = vector.shape_cast %18 : vector<16x16x16xbf16> to vector<256x16xbf16>
    %20 = vector.extract_strided_slice %11 {offsets = [1, 1, 0], sizes = [16, 16, 16], strides = [1, 1, 1]} : vector<18x18x16xbf16> to vector<16x16x16xbf16>
    %21 = vector.shape_cast %20 : vector<16x16x16xbf16> to vector<256x16xbf16>
    %22 = vector.extract_strided_slice %11 {offsets = [1, 2, 0], sizes = [16, 16, 16], strides = [1, 1, 1]} : vector<18x18x16xbf16> to vector<16x16x16xbf16>
    %23 = vector.shape_cast %22 : vector<16x16x16xbf16> to vector<256x16xbf16>
    %24 = vector.extract_strided_slice %11 {offsets = [2, 0, 0], sizes = [16, 16, 16], strides = [1, 1, 1]} : vector<18x18x16xbf16> to vector<16x16x16xbf16>
    %25 = vector.shape_cast %24 : vector<16x16x16xbf16> to vector<256x16xbf16>
    %26 = vector.extract_strided_slice %11 {offsets = [2, 1, 0], sizes = [16, 16, 16], strides = [1, 1, 1]} : vector<18x18x16xbf16> to vector<16x16x16xbf16>
    %27 = vector.shape_cast %26 : vector<16x16x16xbf16> to vector<256x16xbf16>
    %28 = vector.extract_strided_slice %11 {offsets = [2, 2, 0], sizes = [16, 16, 16], strides = [1, 1, 1]} : vector<18x18x16xbf16> to vector<16x16x16xbf16>
    %29 = vector.shape_cast %28 : vector<16x16x16xbf16> to vector<256x16xbf16>
    %30 = tpu.concatenate %13, %15, %17, %19, %21, %23, %25, %27, %29 in 1 : vector<256x16xbf16>, vector<256x16xbf16>, vector<256x16xbf16>, vector<256x16xbf16>, vector<256x16xbf16>, vector<256x16xbf16>, vector<256x16xbf16>, vector<256x16xbf16>, vector<256x16xbf16> -> vector<256x144xbf16>
    %cst_12 = arith.constant dense<0.000000e+00> : vector<256x8xf32>
    %31 = tpu.matmul %30, %5, %cst_12 {dimension_numbers = #tpu.dot_dimension_numbers<[1], [0], [0], [1], [0, 0, 1, 1], [], []>} : vector<256x144xbf16>, vector<144x8xbf16>, vector<256x8xf32> -> vector<256x8xf32>
    %32 = vector.broadcast %6 : vector<1x8xf32> to vector<256x8xf32>
    %33 = arith.addf %31, %32 : vector<256x8xf32>
    %cst_13 = arith.constant 0.000000e+00 : f32
    %34 = vector.broadcast %cst_13 : f32 to vector<256x8xf32>
    %35 = arith.cmpf oge, %33, %34 : vector<256x8xf32>
    %cst_14 = arith.constant 1.000000e-01 : f32
    %36 = vector.broadcast %cst_14 : f32 to vector<256x8xf32>
    %37 = arith.mulf %36, %33 : vector<256x8xf32>
    %38 = arith.select %35, %33, %37 : vector<256x8xi1>, vector<256x8xf32>
    %39 = vector.shape_cast %38 : vector<256x8xf32> to vector<16x16x8xf32>
    %c0_15 = arith.constant 0 : index
    %c0_16 = arith.constant 0 : index
    %40 = vector.load %arg5[%c0_15, %c0_16] : memref<72x8xbf16, #tpu.memory_space<vmem>>, vector<72x8xbf16>
    %c0_17 = arith.constant 0 : index
    %c0_18 = arith.constant 0 : index
    %41 = vector.load %arg6[%c0_17, %c0_18] : memref<1x8xf32, #tpu.memory_space<vmem>>, vector<1x8xf32>
    %42 = arith.truncf %39 : vector<16x16x8xf32> to vector<16x16x8xbf16>
    %cst_19 = arith.constant 0.000000e+00 : bf16
    %43 = vector.broadcast %cst_19 : bf16 to vector<1x16x8xbf16>
    %44 = tpu.concatenate %43, %42, %43 in 0 : vector<1x16x8xbf16>, vector<16x16x8xbf16>, vector<1x16x8xbf16> -> vector<18x16x8xbf16>
    %cst_20 = arith.constant 0.000000e+00 : bf16
    %45 = vector.broadcast %cst_20 : bf16 to vector<18x1x8xbf16>
    %46 = tpu.concatenate %45, %44, %45 in 1 : vector<18x1x8xbf16>, vector<18x16x8xbf16>, vector<18x1x8xbf16> -> vector<18x18x8xbf16>
    %47 = vector.extract_strided_slice %46 {offsets = [0, 0, 0], sizes = [16, 16, 8], strides = [1, 1, 1]} : vector<18x18x8xbf16> to vector<16x16x8xbf16>
    %48 = vector.shape_cast %47 : vector<16x16x8xbf16> to vector<256x8xbf16>
    %49 = vector.extract_strided_slice %46 {offsets = [0, 1, 0], sizes = [16, 16, 8], strides = [1, 1, 1]} : vector<18x18x8xbf16> to vector<16x16x8xbf16>
    %50 = vector.shape_cast %49 : vector<16x16x8xbf16> to vector<256x8xbf16>
    %51 = vector.extract_strided_slice %46 {offsets = [0, 2, 0], sizes = [16, 16, 8], strides = [1, 1, 1]} : vector<18x18x8xbf16> to vector<16x16x8xbf16>
    %52 = vector.shape_cast %51 : vector<16x16x8xbf16> to vector<256x8xbf16>
    %53 = vector.extract_strided_slice %46 {offsets = [1, 0, 0], sizes = [16, 16, 8], strides = [1, 1, 1]} : vector<18x18x8xbf16> to vector<16x16x8xbf16>
    %54 = vector.shape_cast %53 : vector<16x16x8xbf16> to vector<256x8xbf16>
    %55 = vector.extract_strided_slice %46 {offsets = [1, 1, 0], sizes = [16, 16, 8], strides = [1, 1, 1]} : vector<18x18x8xbf16> to vector<16x16x8xbf16>
    %56 = vector.shape_cast %55 : vector<16x16x8xbf16> to vector<256x8xbf16>
    %57 = vector.extract_strided_slice %46 {offsets = [1, 2, 0], sizes = [16, 16, 8], strides = [1, 1, 1]} : vector<18x18x8xbf16> to vector<16x16x8xbf16>
    %58 = vector.shape_cast %57 : vector<16x16x8xbf16> to vector<256x8xbf16>
    %59 = vector.extract_strided_slice %46 {offsets = [2, 0, 0], sizes = [16, 16, 8], strides = [1, 1, 1]} : vector<18x18x8xbf16> to vector<16x16x8xbf16>
    %60 = vector.shape_cast %59 : vector<16x16x8xbf16> to vector<256x8xbf16>
    %61 = vector.extract_strided_slice %46 {offsets = [2, 1, 0], sizes = [16, 16, 8], strides = [1, 1, 1]} : vector<18x18x8xbf16> to vector<16x16x8xbf16>
    %62 = vector.shape_cast %61 : vector<16x16x8xbf16> to vector<256x8xbf16>
    %63 = vector.extract_strided_slice %46 {offsets = [2, 2, 0], sizes = [16, 16, 8], strides = [1, 1, 1]} : vector<18x18x8xbf16> to vector<16x16x8xbf16>
    %64 = vector.shape_cast %63 : vector<16x16x8xbf16> to vector<256x8xbf16>
    %65 = tpu.concatenate %48, %50, %52, %54, %56, %58, %60, %62, %64 in 1 : vector<256x8xbf16>, vector<256x8xbf16>, vector<256x8xbf16>, vector<256x8xbf16>, vector<256x8xbf16>, vector<256x8xbf16>, vector<256x8xbf16>, vector<256x8xbf16>, vector<256x8xbf16> -> vector<256x72xbf16>
    %cst_21 = arith.constant dense<0.000000e+00> : vector<256x8xf32>
    %66 = tpu.matmul %65, %40, %cst_21 {dimension_numbers = #tpu.dot_dimension_numbers<[1], [0], [0], [1], [0, 0, 1, 1], [], []>} : vector<256x72xbf16>, vector<72x8xbf16>, vector<256x8xf32> -> vector<256x8xf32>
    %67 = vector.broadcast %41 : vector<1x8xf32> to vector<256x8xf32>
    %68 = arith.addf %66, %67 : vector<256x8xf32>
    %69 = vector.shape_cast %68 : vector<256x8xf32> to vector<16x16x8xf32>
    %70 = arith.addf %3, %69 : vector<16x16x8xf32>
    %c0_22 = arith.constant 0 : index
    %c0_23 = arith.constant 0 : index
    %c0_24 = arith.constant 0 : index
    %c0_25 = arith.constant 0 : index
    %71 = vector.load %arg7[%c0_22, %c0_23, %c0_24, %c0_25] : memref<1x16x16x8xf32, #tpu.memory_space<vmem>>, vector<1x16x16x8xf32>
    %72 = vector.shape_cast %71 : vector<1x16x16x8xf32> to vector<16x16x8xf32>
    %73 = vector.shape_cast %70 : vector<16x16x8xf32> to vector<1x16x16x8xf32>
    tpu.vector_store %arg7[%c0_22, %c0_23, %c0_24, %c0_25], %73 {strides = array<i32>} : memref<1x16x16x8xf32, #tpu.memory_space<vmem>>, vector<1x16x16x8xf32>,
    return
  }
  func.func @transform_0(%arg0: i32) -> (i32, i32, i32, i32) {
    %c0_i32 = arith.constant 0 : i32
    %c0_i32_0 = arith.constant 0 : i32
    %c0_i32_1 = arith.constant 0 : i32
    %c0_i32_2 = arith.constant 0 : i32
    return %arg0, %c0_i32, %c0_i32_0, %c0_i32_1 : i32, i32, i32, i32
  }
  func.func @transform_1(%arg0: i32) -> (i32, i32, i32, i32) {
    %c0_i32 = arith.constant 0 : i32
    %c0_i32_0 = arith.constant 0 : i32
    %c0_i32_1 = arith.constant 0 : i32
    %c0_i32_2 = arith.constant 0 : i32
    return %arg0, %c0_i32, %c0_i32_0, %c0_i32_1 : i32, i32, i32, i32
  }
  func.func @transform_2(%arg0: i32) -> (i32, i32) {
    %c0_i32 = arith.constant 0 : i32
    %c0_i32_0 = arith.constant 0 : i32
    %c0_i32_1 = arith.constant 0 : i32
    return %c0_i32, %c0_i32_0 : i32, i32
  }
  func.func @transform_3(%arg0: i32) -> (i32, i32) {
    %c0_i32 = arith.constant 0 : i32
    %c0_i32_0 = arith.constant 0 : i32
    %c0_i32_1 = arith.constant 0 : i32
    return %c0_i32, %c0_i32_0 : i32, i32
  }
  func.func @transform_4(%arg0: i32) -> (i32, i32) {
    %c0_i32 = arith.constant 0 : i32
    %c0_i32_0 = arith.constant 0 : i32
    %c0_i32_1 = arith.constant 0 : i32
    return %c0_i32, %c0_i32_0 : i32, i32
  }
  func.func @transform_5(%arg0: i32) -> (i32, i32) {
    %c0_i32 = arith.constant 0 : i32
    %c0_i32_0 = arith.constant 0 : i32
    %c0_i32_1 = arith.constant 0 : i32
    return %c0_i32, %c0_i32_0 : i32, i32
  }
  func.func @transform_6(%arg0: i32) -> (i32, i32, i32, i32) {
    %c0_i32 = arith.constant 0 : i32
    %c0_i32_0 = arith.constant 0 : i32
    %c0_i32_1 = arith.constant 0 : i32
    %c0_i32_2 = arith.constant 0 : i32
    return %arg0, %c0_i32, %c0_i32_0, %c0_i32_1 : i32, i32, i32, i32
  }
}

</mosaic_0001>

<llo_original>
// kernel: tpu_custom_call.1
$region0: #{tpu_custom_call.1}
  #allocation0 [shape = 'u32[]', space=smem, size = 0x4, offset = 0x4, fixed_abs, tag = 'smem constant byte address 0x4 - core index']
  #allocation1 [shape = 'u32[144,128]{1,0:T(1,128)}', space=vmem, size = 0x12000, scoped, tag = 'internal scratch']
  %s0 = inlined_call_operand.vmem [shape: f32[2,16,16,8], index: 0, kind: input, shape index: {}]
  %s1 = inlined_call_operand.vmem [shape: f32[2,16,16,8], index: 1, kind: input, shape index: {}]
  %s2 = inlined_call_operand.vmem [shape: bf16[144,8], index: 2, kind: input, shape index: {}]
  %s3 = inlined_call_operand.vmem [shape: f32[1,8], index: 3, kind: input, shape index: {}]
  %s4 = inlined_call_operand.vmem [shape: bf16[72,8], index: 4, kind: input, shape index: {}]
  %s5 = inlined_call_operand.vmem [shape: f32[1,8], index: 5, kind: input, shape index: {}]
  %s6 = inlined_call_operand.vmem [shape: f32[2,16,16,8], index: 6, kind: output, shape index: {}]
  %s7 = sld [smem:[#allocation0]]
  $region57: #{tpu_custom_call.1} parent=0
    _
  %s9 = ssub.s32 1, %s7
  %s10 = scalar_select 0, %s9, %s7
  loop: start=0, step=1, limit=4
  $region2: #{tpu_custom_call.1} parent=0 // loop_pre_header
    _
  $region3: #{tpu_custom_call.1} parent=0 // loop_header
    %s12 = sphi 0, %s16
    %p13 = scmp.ge.s32.totalorder %s12, 4
    %s22 = sphi 0, %s24
    %s25 = sphi 0, %s22
    %s26 = sphi 0, %s25
    %s42 = sphi 0, %s26
    %s48 = sphi 0, %s50
    %s51 = sphi 0, %s48
    %s52 = sphi 0, %s51
    %s68 = sphi 0, %s52
    %s72 = sphi 0, %s72
    %s74 = sphi 0, %s72
    %s75 = sphi 0, %s74
    %s89 = sphi 0, %s75
    %s93 = sphi 0, %s93
    %s95 = sphi 0, %s93
    %s96 = sphi 0, %s95
    %s110 = sphi 0, %s96
    %s114 = sphi 0, %s114
    %s116 = sphi 0, %s114
    %s117 = sphi 0, %s116
    %s131 = sphi 0, %s117
    %s135 = sphi 0, %s135
    %s137 = sphi 0, %s135
    %s138 = sphi 0, %s137
    %s152 = sphi 0, %s138
    %s158 = sphi 0, %s160
    %s161 = sphi 0, %s158
    %s162 = sphi 0, %s161
    %s178 = sphi 0, %s162
  $region4: #{tpu_custom_call.1} parent=0 // loop_header_branch
    %15 = sbr.rel (%p13) target = $region8
  $region5: #{tpu_custom_call.1} parent=0 // loop_body
    %s17 = ssub.s32 %s12, 1
    %s18 = ssub.s32 %s12, 2
    %s19 = sadd.s32 %s12, 1
    %s20 = ssub.s32 %s12, %s19
    %p21 = scmp.eq.s32.totalorder %s20, 0
    %s23 = sadd.s32 %s22, 1
    %s24 = scalar_select %p21, %s22, %s23
    %p27 = pneg %p21
    %p28 = scmp.eq.s32.totalorder %s12, 1
    %p29 = por %p27, %p28
    %p30 = scmp.ne.s32.totalorder %s22, %s25
    %p31 = scmp.eq.s32.totalorder %s12, 0
    %p32 = por %p30, %p31
    %p33 = scmp.ne.s32.totalorder %s22, %s25
    %p34 = scmp.eq.s32.totalorder %s17, 1
    %p35 = por %p33, %p34
    %p36 = scmp.ne.s32.totalorder %s25, %s26
    %p37 = scmp.eq.s32.totalorder %s17, 0
    %p38 = por %p36, %p37
    %p39 = scmp.ne.s32.totalorder %s25, %s26
    %p40 = scmp.eq.s32.totalorder %s18, 1
    %p41 = por %p39, %p40
    %p43 = scmp.ne.s32.totalorder %s26, %s42
    %p44 = scmp.eq.s32.totalorder %s18, 0
    %p45 = por %p43, %p44
    %s46 = ssub.s32 %s12, %s19
    %p47 = scmp.eq.s32.totalorder %s46, 0
    %s49 = sadd.s32 %s48, 1
    %s50 = scalar_select %p47, %s48, %s49
    %p53 = pneg %p47
    %p54 = scmp.eq.s32.totalorder %s12, 1
    %p55 = por %p53, %p54
    %p56 = scmp.ne.s32.totalorder %s48, %s51
    %p57 = scmp.eq.s32.totalorder %s12, 0
    %p58 = por %p56, %p57
    %p59 = scmp.ne.s32.totalorder %s48, %s51
    %p60 = scmp.eq.s32.totalorder %s17, 1
    %p61 = por %p59, %p60
    %p62 = scmp.ne.s32.totalorder %s51, %s52
    %p63 = scmp.eq.s32.totalorder %s17, 0
    %p64 = por %p62, %p63
    %p65 = scmp.ne.s32.totalorder %s51, %s52
    %p66 = scmp.eq.s32.totalorder %s18, 1
    %p67 = por %p65, %p66
    %p69 = scmp.ne.s32.totalorder %s52, %s68
    %p70 = scmp.eq.s32.totalorder %s18, 0
    %p71 = por %p69, %p70
    %s73 = sadd.s32 %s72, 1
    %p76 = scmp.eq.s32.totalorder %s12, 1
    %p77 = scmp.ne.s32.totalorder %s72, %s74
    %p78 = scmp.eq.s32.totalorder %s12, 0
    %p79 = por %p77, %p78
    %p80 = scmp.ne.s32.totalorder %s72, %s74
    %p81 = scmp.eq.s32.totalorder %s17, 1
    %p82 = por %p80, %p81
    %p83 = scmp.ne.s32.totalorder %s74, %s75
    %p84 = scmp.eq.s32.totalorder %s17, 0
    %p85 = por %p83, %p84
    %p86 = scmp.ne.s32.totalorder %s74, %s75
    %p87 = scmp.eq.s32.totalorder %s18, 1
    %p88 = por %p86, %p87
    %p90 = scmp.ne.s32.totalorder %s75, %s89
    %p91 = scmp.eq.s32.totalorder %s18, 0
    %p92 = por %p90, %p91
    %s94 = sadd.s32 %s93, 1
    %p97 = scmp.eq.s32.totalorder %s12, 1
    %p98 = scmp.ne.s32.totalorder %s93, %s95
    %p99 = scmp.eq.s32.totalorder %s12, 0
    %p100 = por %p98, %p99
    %p101 = scmp.ne.s32.totalorder %s93, %s95
    %p102 = scmp.eq.s32.totalorder %s17, 1
    %p103 = por %p101, %p102
    %p104 = scmp.ne.s32.totalorder %s95, %s96
    %p105 = scmp.eq.s32.totalorder %s17, 0
    %p106 = por %p104, %p105
    %p107 = scmp.ne.s32.totalorder %s95, %s96
    %p108 = scmp.eq.s32.totalorder %s18, 1
    %p109 = por %p107, %p108
    %p111 = scmp.ne.s32.totalorder %s96, %s110
    %p112 = scmp.eq.s32.totalorder %s18, 0
    %p113 = por %p111, %p112
    %s115 = sadd.s32 %s114, 1
    %p118 = scmp.eq.s32.totalorder %s12, 1
    %p119 = scmp.ne.s32.totalorder %s114, %s116
    %p120 = scmp.eq.s32.totalorder %s12, 0
    %p121 = por %p119, %p120
    %p122 = scmp.ne.s32.totalorder %s114, %s116
    %p123 = scmp.eq.s32.totalorder %s17, 1
    %p124 = por %p122, %p123
    %p125 = scmp.ne.s32.totalorder %s116, %s117
    %p126 = scmp.eq.s32.totalorder %s17, 0
    %p127 = por %p125, %p126
    %p128 = scmp.ne.s32.totalorder %s116, %s117
    %p129 = scmp.eq.s32.totalorder %s18, 1
    %p130 = por %p128, %p129
    %p132 = scmp.ne.s32.totalorder %s117, %s131
    %p133 = scmp.eq.s32.totalorder %s18, 0
    %p134 = por %p132, %p133
    %s136 = sadd.s32 %s135, 1
    %p139 = scmp.eq.s32.totalorder %s12, 1
    %p140 = scmp.ne.s32.totalorder %s135, %s137
    %p141 = scmp.eq.s32.totalorder %s12, 0
    %p142 = por %p140, %p141
    %p143 = scmp.ne.s32.totalorder %s135, %s137
    %p144 = scmp.eq.s32.totalorder %s17, 1
    %p145 = por %p143, %p144
    %p146 = scmp.ne.s32.totalorder %s137, %s138
    %p147 = scmp.eq.s32.totalorder %s17, 0
    %p148 = por %p146, %p147
    %p149 = scmp.ne.s32.totalorder %s137, %s138
    %p150 = scmp.eq.s32.totalorder %s18, 1
    %p151 = por %p149, %p150
    %p153 = scmp.ne.s32.totalorder %s138, %s152
    %p154 = scmp.eq.s32.totalorder %s18, 0
    %p155 = por %p153, %p154
    %s156 = ssub.s32 %s12, %s19
    %p157 = scmp.eq.s32.totalorder %s156, 0
    %s159 = sadd.s32 %s158, 1
    %s160 = scalar_select %p157, %s158, %s159
    %p163 = pneg %p157
    %p164 = scmp.eq.s32.totalorder %s12, 1
    %p165 = por %p163, %p164
    %p166 = scmp.ne.s32.totalorder %s158, %s161
    %p167 = scmp.eq.s32.totalorder %s12, 0
    %p168 = por %p166, %p167
    %p169 = scmp.ne.s32.totalorder %s158, %s161
    %p170 = scmp.eq.s32.totalorder %s17, 1
    %p171 = por %p169, %p170
    %p172 = scmp.ne.s32.totalorder %s161, %s162
    %p173 = scmp.eq.s32.totalorder %s17, 0
    %p174 = por %p172, %p173
    %p175 = scmp.ne.s32.totalorder %s161, %s162
    %p176 = scmp.eq.s32.totalorder %s18, 1
    %p177 = por %p175, %p176
    %p179 = scmp.ne.s32.totalorder %s162, %s178
    %p180 = scmp.eq.s32.totalorder %s18, 0
    %p181 = por %p179, %p180
    %p182 = scmp.le.s32.totalorder 1, %s12
    %p183 = scmp.lt.s32.totalorder %s12, 3
    %p184 = pnand %p182, %p183
    %p185 = pneg %p184
    // Predicated region
    $region9: #{tpu_custom_call.1} parent=5 // pred_check
      _
    $region10: #{tpu_custom_call.1} parent=5 // pred_check_branch
      %187 = sbr.rel (%p184) target = $region12
    $region11: #{tpu_custom_call.1} parent=5 // pred_region
      %s188 = ssub.s32 %s12, 1
      // Predicated region
      $region13: #{tpu_custom_call.1} parent=11 // pred_check
        %p189 = pneg %p85
      $region14: #{tpu_custom_call.1} parent=11 // pred_check_branch
        %191 = sbr.rel (%p189) target = $region16
      $region15: #{tpu_custom_call.1} parent=11 // pred_region
        _
      $region16: #{tpu_custom_call.1} parent=11 // pred_fallthru
        _
      // Predicated region
      $region17: #{tpu_custom_call.1} parent=11 // pred_check
        %p192 = pneg %p106
      $region18: #{tpu_custom_call.1} parent=11 // pred_check_branch
        %194 = sbr.rel (%p192) target = $region20
      $region19: #{tpu_custom_call.1} parent=11 // pred_region
        _
      $region20: #{tpu_custom_call.1} parent=11 // pred_fallthru
        _
      // Predicated region
      $region21: #{tpu_custom_call.1} parent=11 // pred_check
        %p195 = pneg %p127
      $region22: #{tpu_custom_call.1} parent=11 // pred_check_branch
        %197 = sbr.rel (%p195) target = $region24
      $region23: #{tpu_custom_call.1} parent=11 // pred_region
        _
      $region24: #{tpu_custom_call.1} parent=11 // pred_fallthru
        _
      // Predicated region
      $region25: #{tpu_custom_call.1} parent=11 // pred_check
        %p198 = pneg %p148
      $region26: #{tpu_custom_call.1} parent=11 // pred_check_branch
        %200 = sbr.rel (%p198) target = $region28
      $region27: #{tpu_custom_call.1} parent=11 // pred_region
        _
      $region28: #{tpu_custom_call.1} parent=11 // pred_fallthru
        _
    $region12: #{tpu_custom_call.1} parent=5 // pred_fallthru
      _
    %p201 = scmp.lt.s32.totalorder %s12, 2
    // Predicated region
    $region29: #{tpu_custom_call.1} parent=5 // pred_check
      %p202 = pneg %p201
    $region30: #{tpu_custom_call.1} parent=5 // pred_check_branch
      %204 = sbr.rel (%p202) target = $region32
    $region31: #{tpu_custom_call.1} parent=5 // pred_region
      // Predicated region
      $region33: #{tpu_custom_call.1} parent=31 // pred_check
        %p205 = pneg %p32
      $region34: #{tpu_custom_call.1} parent=31 // pred_check_branch
        %207 = sbr.rel (%p205) target = $region36
      $region35: #{tpu_custom_call.1} parent=31 // pred_region
        %p208 = scmp.lt.s32.totalorder %s12, 1
        %s209 = scalar_select %p208, %s12, 1
        %s210 = smul.addr %s209, 32
        %s211 = smul.addr %s210, 8
        %s212 = scalar_lea.vmem %s0, %s211
      $region36: #{tpu_custom_call.1} parent=31 // pred_fallthru
        _
      // Predicated region
      $region37: #{tpu_custom_call.1} parent=31 // pred_check
        %p213 = pneg %p58
      $region38: #{tpu_custom_call.1} parent=31 // pred_check_branch
        %215 = sbr.rel (%p213) target = $region40
      $region39: #{tpu_custom_call.1} parent=31 // pred_region
        %p216 = scmp.lt.s32.totalorder %s12, 1
        %s217 = scalar_select %p216, %s12, 1
        %s218 = smul.addr %s217, 32
        %s219 = smul.addr %s218, 8
        %s220 = scalar_lea.vmem %s1, %s219
      $region40: #{tpu_custom_call.1} parent=31 // pred_fallthru
        _
    $region32: #{tpu_custom_call.1} parent=5 // pred_fallthru
      _
    %p221 = scmp.le.s32.totalorder 1, %s12
    %p222 = scmp.lt.s32.totalorder %s12, 3
    %p223 = pnand %p221, %p222
    %p224 = pneg %p223
    // Predicated region
    $region41: #{tpu_custom_call.1} parent=5 // pred_check
      _
    $region42: #{tpu_custom_call.1} parent=5 // pred_check_branch
      %226 = sbr.rel (%p223) target = $region44
    $region43: #{tpu_custom_call.1} parent=5 // pred_region
      %s227 = ssub.s32 %s12, 1
      %p228 = scmp.lt.s32.totalorder %s17, 1
      %s229 = scalar_select %p228, %s17, 1
      %s230 = smul.addr %s229, 32
      %s231 = smul.addr %s230, 8
      %s232 = scalar_lea.vmem %s0, %s231
      %p233 = pneg %p38
      %p234 = pneg %p35
      %p235 = scmp.lt.s32.totalorder %s17, 1
      %s236 = scalar_select %p235, %s17, 1
      %s237 = smul.addr %s236, 32
      %s238 = smul.addr %s237, 8
      %s239 = scalar_lea.vmem %s1, %s238
      %p240 = pneg %p64
      %p241 = pneg %p61
      %p242 = pneg %p85
      %p243 = pneg %p82
      %p244 = pneg %p106
      %p245 = pneg %p103
      %p246 = pneg %p127
      %p247 = pneg %p124
      %p248 = pneg %p148
      %p249 = pneg %p145
      %p250 = pneg %p174
      %p251 = pneg %p171
      %p252 = scmp.lt.s32.totalorder %s17, 1
      %s253 = scalar_select %p252, %s17, 1
      %s254 = smul.addr %s253, 32
      %s255 = smul.addr %s254, 8
      %s256 = scalar_lea.vmem %s6, %s255
      %p257 = scmp.lt.s32.totalorder %s17, 1
      %s258 = scalar_select %p257, %s17, 1
      %s259 = smul.addr %s258, 32
      %s260 = smul.addr %s259, 8
      %s261 = scalar_lea.vmem %s0, %s260
      %p262 = scmp.lt.s32.totalorder %s17, 1
      %s263 = scalar_select %p262, %s17, 1
      %s264 = smul.addr %s263, 32
      %s265 = smul.addr %s264, 8
      %s266 = scalar_lea.vmem %s1, %s265
      %p267 = scmp.lt.s32.totalorder %s17, 1
      %s268 = scalar_select %p267, %s17, 1
      %s269 = smul.addr %s268, 32
      %s270 = smul.addr %s269, 8
      %s271 = scalar_lea.vmem %s6, %s270
      %v273 = vld [vmem:[%s261] sm:$0xff]
      %v274 = vld [vmem:[%s261 + $0x8] sm:$0xff]
      %v275 = vld [vmem:[%s261 + $0x10] sm:$0xff]
      %v276 = vld [vmem:[%s261 + $0x18] sm:$0xff]
      %v277 = vld [vmem:[%s261 + $0x20] sm:$0xff]
      %v278 = vld [vmem:[%s261 + $0x28] sm:$0xff]
      %v279 = vld [vmem:[%s261 + $0x30] sm:$0xff]
      %v280 = vld [vmem:[%s261 + $0x38] sm:$0xff]
      %v281 = vld [vmem:[%s261 + $0x40] sm:$0xff]
      %v282 = vld [vmem:[%s261 + $0x48] sm:$0xff]
      %v283 = vld [vmem:[%s261 + $0x50] sm:$0xff]
      %v284 = vld [vmem:[%s261 + $0x58] sm:$0xff]
      %v285 = vld [vmem:[%s261 + $0x60] sm:$0xff]
      %v286 = vld [vmem:[%s261 + $0x68] sm:$0xff]
      %v287 = vld [vmem:[%s261 + $0x70] sm:$0xff]
      %v288 = vld [vmem:[%s261 + $0x78] sm:$0xff]
      %v289 = vld [vmem:[%s261 + $0x80] sm:$0xff]
      %v290 = vld [vmem:[%s261 + $0x88] sm:$0xff]
      %v291 = vld [vmem:[%s261 + $0x90] sm:$0xff]
      %v292 = vld [vmem:[%s261 + $0x98] sm:$0xff]
      %v293 = vld [vmem:[%s261 + $0xa0] sm:$0xff]
      %v294 = vld [vmem:[%s261 + $0xa8] sm:$0xff]
      %v295 = vld [vmem:[%s261 + $0xb0] sm:$0xff]
      %v296 = vld [vmem:[%s261 + $0xb8] sm:$0xff]
      %v297 = vld [vmem:[%s261 + $0xc0] sm:$0xff]
      %v298 = vld [vmem:[%s261 + $0xc8] sm:$0xff]
      %v299 = vld [vmem:[%s261 + $0xd0] sm:$0xff]
      %v300 = vld [vmem:[%s261 + $0xd8] sm:$0xff]
      %v301 = vld [vmem:[%s261 + $0xe0] sm:$0xff]
      %v302 = vld [vmem:[%s261 + $0xe8] sm:$0xff]
      %v303 = vld [vmem:[%s261 + $0xf0] sm:$0xff]
      %v304 = vld [vmem:[%s261 + $0xf8] sm:$0xff]
      %v305 = vld [vmem:[%s266] sm:$0xff]
      %v306 = vld [vmem:[%s266 + $0x8] sm:$0xff]
      %v307 = vld [vmem:[%s266 + $0x10] sm:$0xff]
      %v308 = vld [vmem:[%s266 + $0x18] sm:$0xff]
      %v309 = vld [vmem:[%s266 + $0x20] sm:$0xff]
      %v310 = vld [vmem:[%s266 + $0x28] sm:$0xff]
      %v311 = vld [vmem:[%s266 + $0x30] sm:$0xff]
      %v312 = vld [vmem:[%s266 + $0x38] sm:$0xff]
      %v313 = vld [vmem:[%s266 + $0x40] sm:$0xff]
      %v314 = vld [vmem:[%s266 + $0x48] sm:$0xff]
      %v315 = vld [vmem:[%s266 + $0x50] sm:$0xff]
      %v316 = vld [vmem:[%s266 + $0x58] sm:$0xff]
      %v317 = vld [vmem:[%s266 + $0x60] sm:$0xff]
      %v318 = vld [vmem:[%s266 + $0x68] sm:$0xff]
      %v319 = vld [vmem:[%s266 + $0x70] sm:$0xff]
      %v320 = vld [vmem:[%s266 + $0x78] sm:$0xff]
      %v321 = vld [vmem:[%s266 + $0x80] sm:$0xff]
      %v322 = vld [vmem:[%s266 + $0x88] sm:$0xff]
      %v323 = vld [vmem:[%s266 + $0x90] sm:$0xff]
      %v324 = vld [vmem:[%s266 + $0x98] sm:$0xff]
      %v325 = vld [vmem:[%s266 + $0xa0] sm:$0xff]
      %v326 = vld [vmem:[%s266 + $0xa8] sm:$0xff]
      %v327 = vld [vmem:[%s266 + $0xb0] sm:$0xff]
      %v328 = vld [vmem:[%s266 + $0xb8] sm:$0xff]
      %v329 = vld [vmem:[%s266 + $0xc0] sm:$0xff]
      %v330 = vld [vmem:[%s266 + $0xc8] sm:$0xff]
      %v331 = vld [vmem:[%s266 + $0xd0] sm:$0xff]
      %v332 = vld [vmem:[%s266 + $0xd8] sm:$0xff]
      %v333 = vld [vmem:[%s266 + $0xe0] sm:$0xff]
      %v334 = vld [vmem:[%s266 + $0xe8] sm:$0xff]
      %v335 = vld [vmem:[%s266 + $0xf0] sm:$0xff]
      %v336 = vld [vmem:[%s266 + $0xf8] sm:$0xff]
      %369 = vrot.lane.b32.xlu0 %v305, 8
      %v370 = vpop.permute.xlu0 %369
      %371 = vrot.lane.b32.xlu0 %v306, 8
      %v372 = vpop.permute.xlu0 %371
      %373 = vrot.lane.b32.xlu0 %v307, 8
      %v374 = vpop.permute.xlu0 %373
      %375 = vrot.lane.b32.xlu0 %v308, 8
      %v376 = vpop.permute.xlu0 %375
      %377 = vrot.lane.b32.xlu0 %v309, 8
      %v378 = vpop.permute.xlu0 %377
      %379 = vrot.lane.b32.xlu0 %v310, 8
      %v380 = vpop.permute.xlu0 %379
      %381 = vrot.lane.b32.xlu0 %v311, 8
      %v382 = vpop.permute.xlu0 %381
      %383 = vrot.lane.b32.xlu0 %v312, 8
      %v384 = vpop.permute.xlu0 %383
      %385 = vrot.lane.b32.xlu0 %v313, 8
      %v386 = vpop.permute.xlu0 %385
      %387 = vrot.lane.b32.xlu0 %v314, 8
      %v388 = vpop.permute.xlu0 %387
      %389 = vrot.lane.b32.xlu0 %v315, 8
      %v390 = vpop.permute.xlu0 %389
      %391 = vrot.lane.b32.xlu0 %v316, 8
      %v392 = vpop.permute.xlu0 %391
      %393 = vrot.lane.b32.xlu0 %v317, 8
      %v394 = vpop.permute.xlu0 %393
      %395 = vrot.lane.b32.xlu0 %v318, 8
      %v396 = vpop.permute.xlu0 %395
      %397 = vrot.lane.b32.xlu0 %v319, 8
      %v398 = vpop.permute.xlu0 %397
      %399 = vrot.lane.b32.xlu0 %v320, 8
      %v400 = vpop.permute.xlu0 %399
      %401 = vrot.lane.b32.xlu0 %v321, 8
      %v402 = vpop.permute.xlu0 %401
      %403 = vrot.lane.b32.xlu0 %v322, 8
      %v404 = vpop.permute.xlu0 %403
      %405 = vrot.lane.b32.xlu0 %v323, 8
      %v406 = vpop.permute.xlu0 %405
      %407 = vrot.lane.b32.xlu0 %v324, 8
      %v408 = vpop.permute.xlu0 %407
      %409 = vrot.lane.b32.xlu0 %v325, 8
      %v410 = vpop.permute.xlu0 %409
      %411 = vrot.lane.b32.xlu0 %v326, 8
      %v412 = vpop.permute.xlu0 %411
      %413 = vrot.lane.b32.xlu0 %v327, 8
      %v414 = vpop.permute.xlu0 %413
      %415 = vrot.lane.b32.xlu0 %v328, 8
      %v416 = vpop.permute.xlu0 %415
      %417 = vrot.lane.b32.xlu0 %v329, 8
      %v418 = vpop.permute.xlu0 %417
      %419 = vrot.lane.b32.xlu0 %v330, 8
      %v420 = vpop.permute.xlu0 %419
      %421 = vrot.lane.b32.xlu0 %v331, 8
      %v422 = vpop.permute.xlu0 %421
      %423 = vrot.lane.b32.xlu0 %v332, 8
      %v424 = vpop.permute.xlu0 %423
      %425 = vrot.lane.b32.xlu0 %v333, 8
      %v426 = vpop.permute.xlu0 %425
      %427 = vrot.lane.b32.xlu0 %v334, 8
      %v428 = vpop.permute.xlu0 %427
      %429 = vrot.lane.b32.xlu0 %v335, 8
      %v430 = vpop.permute.xlu0 %429
      %431 = vrot.lane.b32.xlu0 %v336, 8
      %v432 = vpop.permute.xlu0 %431
      %vm465 = vcmask 64512
      %v466 = vsel %vm465, %v273, %v370
      %v467 = vsel %vm465, %v274, %v372
      %v468 = vsel %vm465, %v275, %v374
      %v469 = vsel %vm465, %v276, %v376
      %v470 = vsel %vm465, %v277, %v378
      %v471 = vsel %vm465, %v278, %v380
      %v472 = vsel %vm465, %v279, %v382
      %v473 = vsel %vm465, %v280, %v384
      %v474 = vsel %vm465, %v281, %v386
      %v475 = vsel %vm465, %v282, %v388
      %v476 = vsel %vm465, %v283, %v390
      %v477 = vsel %vm465, %v284, %v392
      %v478 = vsel %vm465, %v285, %v394
      %v479 = vsel %vm465, %v286, %v396
      %v480 = vsel %vm465, %v287, %v398
      %v481 = vsel %vm465, %v288, %v400
      %v482 = vsel %vm465, %v289, %v402
      %v483 = vsel %vm465, %v290, %v404
      %v484 = vsel %vm465, %v291, %v406
      %v485 = vsel %vm465, %v292, %v408
      %v486 = vsel %vm465, %v293, %v410
      %v487 = vsel %vm465, %v294, %v412
      %v488 = vsel %vm465, %v295, %v414
      %v489 = vsel %vm465, %v296, %v416
      %v490 = vsel %vm465, %v297, %v418
      %v491 = vsel %vm465, %v298, %v420
      %v492 = vsel %vm465, %v299, %v422
      %v493 = vsel %vm465, %v300, %v424
      %v494 = vsel %vm465, %v301, %v426
      %v495 = vsel %vm465, %v302, %v428
      %v496 = vsel %vm465, %v303, %v430
      %v497 = vsel %vm465, %v304, %v432
      %v498 = vld [vmem:[%s2] sm:$0xf]
      %v499 = vld [vmem:[%s2 + $0x4] sm:$0xf]
      %v500 = vld [vmem:[%s2 + $0x8] sm:$0xf]
      %v501 = vld [vmem:[%s2 + $0xc] sm:$0xf]
      %v502 = vld [vmem:[%s2 + $0x10] sm:$0xf]
      %v503 = vld [vmem:[%s2 + $0x14] sm:$0xf]
      %v504 = vld [vmem:[%s2 + $0x18] sm:$0xf]
      %v505 = vld [vmem:[%s2 + $0x1c] sm:$0xf]
      %v506 = vld [vmem:[%s2 + $0x20] sm:$0xf]
      %v507 = vld [vmem:[%s2 + $0x24] sm:$0xf]
      %v508 = vld [vmem:[%s2 + $0x28] sm:$0xf]
      %v509 = vld [vmem:[%s2 + $0x2c] sm:$0xf]
      %v510 = vld [vmem:[%s2 + $0x30] sm:$0xf]
      %v511 = vld [vmem:[%s2 + $0x34] sm:$0xf]
      %v512 = vld [vmem:[%s2 + $0x38] sm:$0xf]
      %v513 = vld [vmem:[%s2 + $0x3c] sm:$0xf]
      %v514 = vld [vmem:[%s2 + $0x40] sm:$0xf]
      %v515 = vld [vmem:[%s2 + $0x44] sm:$0xf]
      %v516 = vld [vmem:[%s3] sm:$0x1]
      %v517 = vpack.c.bf16 %v467, %v466
      %v518 = vpack.c.bf16 %v469, %v468
      %v519 = vpack.c.bf16 %v471, %v470
      %v520 = vpack.c.bf16 %v473, %v472
      %v521 = vpack.c.bf16 %v475, %v474
      %v522 = vpack.c.bf16 %v477, %v476
      %v523 = vpack.c.bf16 %v479, %v478
      %v524 = vpack.c.bf16 %v481, %v480
      %v525 = vpack.c.bf16 %v483, %v482
      %v526 = vpack.c.bf16 %v485, %v484
      %v527 = vpack.c.bf16 %v487, %v486
      %v528 = vpack.c.bf16 %v489, %v488
      %v529 = vpack.c.bf16 %v491, %v490
      %v530 = vpack.c.bf16 %v493, %v492
      %v531 = vpack.c.bf16 %v495, %v494
      %v532 = vpack.c.bf16 %v497, %v496
      %v534 = vshrl.u32 0, 16
      %v536 = vrot.slane %v534, 7
      %v537 = vshll.u32 0, 16
      %v539 = vor.u32 %v536, %v537
      %v541 = vshrl.u32 %v517, 16
      %v543 = vrot.slane %v541, 7
      %v544 = vshll.u32 %v517, 16
      %v546 = vor.u32 %v543, %v544
      %v548 = vshrl.u32 %v518, 16
      %v550 = vrot.slane %v548, 7
      %v551 = vshll.u32 %v518, 16
      %v553 = vor.u32 %v550, %v551
      %v555 = vshrl.u32 %v519, 16
      %v557 = vrot.slane %v555, 7
      %v558 = vshll.u32 %v519, 16
      %v560 = vor.u32 %v557, %v558
      %v562 = vshrl.u32 %v520, 16
      %v564 = vrot.slane %v562, 7
      %v565 = vshll.u32 %v520, 16
      %v567 = vor.u32 %v564, %v565
      %v569 = vshrl.u32 %v521, 16
      %v571 = vrot.slane %v569, 7
      %v572 = vshll.u32 %v521, 16
      %v574 = vor.u32 %v571, %v572
      %v576 = vshrl.u32 %v522, 16
      %v578 = vrot.slane %v576, 7
      %v579 = vshll.u32 %v522, 16
      %v581 = vor.u32 %v578, %v579
      %v583 = vshrl.u32 %v523, 16
      %v585 = vrot.slane %v583, 7
      %v586 = vshll.u32 %v523, 16
      %v588 = vor.u32 %v585, %v586
      %v590 = vshrl.u32 %v524, 16
      %v592 = vrot.slane %v590, 7
      %v593 = vshll.u32 %v524, 16
      %v595 = vor.u32 %v592, %v593
      %v597 = vshrl.u32 %v525, 16
      %v599 = vrot.slane %v597, 7
      %v600 = vshll.u32 %v525, 16
      %v602 = vor.u32 %v599, %v600
      %v604 = vshrl.u32 %v526, 16
      %v606 = vrot.slane %v604, 7
      %v607 = vshll.u32 %v526, 16
      %v609 = vor.u32 %v606, %v607
      %v611 = vshrl.u32 %v527, 16
      %v613 = vrot.slane %v611, 7
      %v614 = vshll.u32 %v527, 16
      %v616 = vor.u32 %v613, %v614
      %v618 = vshrl.u32 %v528, 16
      %v620 = vrot.slane %v618, 7
      %v621 = vshll.u32 %v528, 16
      %v623 = vor.u32 %v620, %v621
      %v625 = vshrl.u32 %v529, 16
      %v627 = vrot.slane %v625, 7
      %v628 = vshll.u32 %v529, 16
      %v630 = vor.u32 %v627, %v628
      %v632 = vshrl.u32 %v530, 16
      %v634 = vrot.slane %v632, 7
      %v635 = vshll.u32 %v530, 16
      %v637 = vor.u32 %v634, %v635
      %v639 = vshrl.u32 %v531, 16
      %v641 = vrot.slane %v639, 7
      %v642 = vshll.u32 %v531, 16
      %v644 = vor.u32 %v641, %v642
      %v646 = vshrl.u32 %v532, 16
      %v648 = vrot.slane %v646, 7
      %v649 = vshll.u32 %v532, 16
      %v651 = vor.u32 %v648, %v649
      %vm686 = vcmask 1040384
      %vm687 = vsmask.f32 256
      %vm688 = vmand %vm686, %vm687
      %v689 = vsel %vm688, 0, %v539
      %v690 = vsel %vm688, 0, %v546
      %v691 = vsel %vm688, 0, %v553
      %v692 = vsel %vm688, 0, %v560
      %v693 = vsel %vm688, 0, %v567
      %v694 = vsel %vm688, 0, %v574
      %v695 = vsel %vm688, 0, %v581
      %v696 = vsel %vm688, 0, %v588
      %v697 = vsel %vm688, 0, %v595
      %v698 = vsel %vm688, 0, %v602
      %v699 = vsel %vm688, 0, %v609
      %v700 = vsel %vm688, 0, %v616
      %v701 = vsel %vm688, 0, %v623
      %v702 = vsel %vm688, 0, %v630
      %v703 = vsel %vm688, 0, %v637
      %v704 = vsel %vm688, 0, %v644
      %v705 = vsel %vm688, 0, %v651
      %v706 = vsel %vm688, %v536, 0
      %v707 = vsel %vm688, %v543, 0
      %v708 = vsel %vm688, %v550, 0
      %v709 = vsel %vm688, %v557, 0
      %v710 = vsel %vm688, %v564, 0
      %v711 = vsel %vm688, %v571, 0
      %v712 = vsel %vm688, %v578, 0
      %v713 = vsel %vm688, %v585, 0
      %v714 = vsel %vm688, %v592, 0
      %v715 = vsel %vm688, %v599, 0
      %v716 = vsel %vm688, %v606, 0
      %v717 = vsel %vm688, %v613, 0
      %v718 = vsel %vm688, %v620, 0
      %v719 = vsel %vm688, %v627, 0
      %v720 = vsel %vm688, %v634, 0
      %v721 = vsel %vm688, %v641, 0
      %v722 = vsel %vm688, %v648, 0
      %vm723 = vsmask.f32 7424
      %v725 = vshrl.u32 %v689, 16
      %v727 = vshll.u32 %v689, 16
      %v729 = vrot.slane %v727, 1
      %v730 = vor.u32 %v725, %v729
      %v732 = vshll.u32 %v706, 16
      %v734 = vrot.slane %v732, 1
      %v735 = vsel %vm723, %v730, %v734
      %v737 = vshrl.u32 %v690, 16
      %v739 = vshll.u32 %v690, 16
      %v741 = vrot.slane %v739, 1
      %v742 = vor.u32 %v737, %v741
      %v744 = vshll.u32 %v707, 16
      %v746 = vrot.slane %v744, 1
      %v747 = vsel %vm723, %v742, %v746
      %v749 = vshrl.u32 %v691, 16
      %v751 = vshll.u32 %v691, 16
      %v753 = vrot.slane %v751, 1
      %v754 = vor.u32 %v749, %v753
      %v756 = vshll.u32 %v708, 16
      %v758 = vrot.slane %v756, 1
      %v759 = vsel %vm723, %v754, %v758
      %v761 = vshrl.u32 %v692, 16
      %v763 = vshll.u32 %v692, 16
      %v765 = vrot.slane %v763, 1
      %v766 = vor.u32 %v761, %v765
      %v768 = vshll.u32 %v709, 16
      %v770 = vrot.slane %v768, 1
      %v771 = vsel %vm723, %v766, %v770
      %v773 = vshrl.u32 %v693, 16
      %v775 = vshll.u32 %v693, 16
      %v777 = vrot.slane %v775, 1
      %v778 = vor.u32 %v773, %v777
      %v780 = vshll.u32 %v710, 16
      %v782 = vrot.slane %v780, 1
      %v783 = vsel %vm723, %v778, %v782
      %v785 = vshrl.u32 %v694, 16
      %v787 = vshll.u32 %v694, 16
      %v789 = vrot.slane %v787, 1
      %v790 = vor.u32 %v785, %v789
      %v792 = vshll.u32 %v711, 16
      %v794 = vrot.slane %v792, 1
      %v795 = vsel %vm723, %v790, %v794
      %v797 = vshrl.u32 %v695, 16
      %v799 = vshll.u32 %v695, 16
      %v801 = vrot.slane %v799, 1
      %v802 = vor.u32 %v797, %v801
      %v804 = vshll.u32 %v712, 16
      %v806 = vrot.slane %v804, 1
      %v807 = vsel %vm723, %v802, %v806
      %v809 = vshrl.u32 %v696, 16
      %v811 = vshll.u32 %v696, 16
      %v813 = vrot.slane %v811, 1
      %v814 = vor.u32 %v809, %v813
      %v816 = vshll.u32 %v713, 16
      %v818 = vrot.slane %v816, 1
      %v819 = vsel %vm723, %v814, %v818
      %v821 = vshrl.u32 %v697, 16
      %v823 = vshll.u32 %v697, 16
      %v825 = vrot.slane %v823, 1
      %v826 = vor.u32 %v821, %v825
      %v828 = vshll.u32 %v714, 16
      %v830 = vrot.slane %v828, 1
      %v831 = vsel %vm723, %v826, %v830
      %v833 = vshrl.u32 %v698, 16
      %v835 = vshll.u32 %v698, 16
      %v837 = vrot.slane %v835, 1
      %v838 = vor.u32 %v833, %v837
      %v840 = vshll.u32 %v715, 16
      %v842 = vrot.slane %v840, 1
      %v843 = vsel %vm723, %v838, %v842
      %v845 = vshrl.u32 %v699, 16
      %v847 = vshll.u32 %v699, 16
      %v849 = vrot.slane %v847, 1
      %v850 = vor.u32 %v845, %v849
      %v852 = vshll.u32 %v716, 16
      %v854 = vrot.slane %v852, 1
      %v855 = vsel %vm723, %v850, %v854
      %v857 = vshrl.u32 %v700, 16
      %v859 = vshll.u32 %v700, 16
      %v861 = vrot.slane %v859, 1
      %v862 = vor.u32 %v857, %v861
      %v864 = vshll.u32 %v717, 16
      %v866 = vrot.slane %v864, 1
      %v867 = vsel %vm723, %v862, %v866
      %v869 = vshrl.u32 %v701, 16
      %v871 = vshll.u32 %v701, 16
      %v873 = vrot.slane %v871, 1
      %v874 = vor.u32 %v869, %v873
      %v876 = vshll.u32 %v718, 16
      %v878 = vrot.slane %v876, 1
      %v879 = vsel %vm723, %v874, %v878
      %v881 = vshrl.u32 %v702, 16
      %v883 = vshll.u32 %v702, 16
      %v885 = vrot.slane %v883, 1
      %v886 = vor.u32 %v881, %v885
      %v888 = vshll.u32 %v719, 16
      %v890 = vrot.slane %v888, 1
      %v891 = vsel %vm723, %v886, %v890
      %v893 = vshrl.u32 %v703, 16
      %v895 = vshll.u32 %v703, 16
      %v897 = vrot.slane %v895, 1
      %v898 = vor.u32 %v893, %v897
      %v900 = vshll.u32 %v720, 16
      %v902 = vrot.slane %v900, 1
      %v903 = vsel %vm723, %v898, %v902
      %v905 = vshrl.u32 %v704, 16
      %v907 = vshll.u32 %v704, 16
      %v909 = vrot.slane %v907, 1
      %v910 = vor.u32 %v905, %v909
      %v912 = vshll.u32 %v721, 16
      %v914 = vrot.slane %v912, 1
      %v915 = vsel %vm723, %v910, %v914
      %vm948 = vcmask 1046528
      %v949 = vrot.slane %v689, 1
      %v950 = vrot.slane %v706, 1
      %v951 = vsel %vm948, %v949, %v950
      %v952 = vrot.slane %v690, 1
      %v953 = vrot.slane %v707, 1
      %v954 = vsel %vm948, %v952, %v953
      %v955 = vrot.slane %v691, 1
      %v956 = vrot.slane %v708, 1
      %v957 = vsel %vm948, %v955, %v956
      %v958 = vrot.slane %v692, 1
      %v959 = vrot.slane %v709, 1
      %v960 = vsel %vm948, %v958, %v959
      %v961 = vrot.slane %v693, 1
      %v962 = vrot.slane %v710, 1
      %v963 = vsel %vm948, %v961, %v962
      %v964 = vrot.slane %v694, 1
      %v965 = vrot.slane %v711, 1
      %v966 = vsel %vm948, %v964, %v965
      %v967 = vrot.slane %v695, 1
      %v968 = vrot.slane %v712, 1
      %v969 = vsel %vm948, %v967, %v968
      %v970 = vrot.slane %v696, 1
      %v971 = vrot.slane %v713, 1
      %v972 = vsel %vm948, %v970, %v971
      %v973 = vrot.slane %v697, 1
      %v974 = vrot.slane %v714, 1
      %v975 = vsel %vm948, %v973, %v974
      %v976 = vrot.slane %v698, 1
      %v977 = vrot.slane %v715, 1
      %v978 = vsel %vm948, %v976, %v977
      %v979 = vrot.slane %v699, 1
      %v980 = vrot.slane %v716, 1
      %v981 = vsel %vm948, %v979, %v980
      %v982 = vrot.slane %v700, 1
      %v983 = vrot.slane %v717, 1
      %v984 = vsel %vm948, %v982, %v983
      %v985 = vrot.slane %v701, 1
      %v986 = vrot.slane %v718, 1
      %v987 = vsel %vm948, %v985, %v986
      %v988 = vrot.slane %v702, 1
      %v989 = vrot.slane %v719, 1
      %v990 = vsel %vm948, %v988, %v989
      %v991 = vrot.slane %v703, 1
      %v992 = vrot.slane %v720, 1
      %v993 = vsel %vm948, %v991, %v992
      %v994 = vrot.slane %v704, 1
      %v995 = vrot.slane %v721, 1
      %v996 = vsel %vm948, %v994, %v995
      %v998 = vshrl.u32 %v705, 16
      %v1000 = vshll.u32 %v705, 16
      %v1002 = vrot.slane %v1000, 1
      %v1003 = vor.u32 %v998, %v1002
      %v1005 = vshll.u32 %v722, 16
      %v1007 = vrot.slane %v1005, 1
      %v1008 = vsel %vm723, %v1003, %v1007
      %v1011 = vrot.slane %v705, 1
      %v1012 = vrot.slane %v722, 1
      %v1013 = vsel %vm948, %v1011, %v1012
      %1014 = vrot.lane.b32.xlu0 %v735, 16
      %v1015 = vpop.permute.xlu0 %1014
      %1016 = vrot.lane.b32.xlu0 %v747, 16
      %v1017 = vpop.permute.xlu0 %1016
      %1018 = vrot.lane.b32.xlu0 %v759, 16
      %v1019 = vpop.permute.xlu0 %1018
      %1020 = vrot.lane.b32.xlu0 %v771, 16
      %v1021 = vpop.permute.xlu0 %1020
      %1022 = vrot.lane.b32.xlu0 %v783, 16
      %v1023 = vpop.permute.xlu0 %1022
      %1024 = vrot.lane.b32.xlu0 %v795, 16
      %v1025 = vpop.permute.xlu0 %1024
      %1026 = vrot.lane.b32.xlu0 %v807, 16
      %v1027 = vpop.permute.xlu0 %1026
      %1028 = vrot.lane.b32.xlu0 %v819, 16
      %v1029 = vpop.permute.xlu0 %1028
      %1030 = vrot.lane.b32.xlu0 %v831, 16
      %v1031 = vpop.permute.xlu0 %1030
      %1032 = vrot.lane.b32.xlu0 %v843, 16
      %v1033 = vpop.permute.xlu0 %1032
      %1034 = vrot.lane.b32.xlu0 %v855, 16
      %v1035 = vpop.permute.xlu0 %1034
      %1036 = vrot.lane.b32.xlu0 %v867, 16
      %v1037 = vpop.permute.xlu0 %1036
      %1038 = vrot.lane.b32.xlu0 %v879, 16
      %v1039 = vpop.permute.xlu0 %1038
      %1040 = vrot.lane.b32.xlu0 %v891, 16
      %v1041 = vpop.permute.xlu0 %1040
      %1042 = vrot.lane.b32.xlu0 %v903, 16
      %v1043 = vpop.permute.xlu0 %1042
      %1044 = vrot.lane.b32.xlu0 %v915, 16
      %v1045 = vpop.permute.xlu0 %1044
      %1046 = vrot.lane.b32.xlu0 %v951, 32
      %v1047 = vpop.permute.xlu0 %1046
      %1048 = vrot.lane.b32.xlu0 %v954, 32
      %v1049 = vpop.permute.xlu0 %1048
      %1050 = vrot.lane.b32.xlu0 %v957, 32
      %v1051 = vpop.permute.xlu0 %1050
      %1052 = vrot.lane.b32.xlu0 %v960, 32
      %v1053 = vpop.permute.xlu0 %1052
      %1054 = vrot.lane.b32.xlu0 %v963, 32
      %v1055 = vpop.permute.xlu0 %1054
      %1056 = vrot.lane.b32.xlu0 %v966, 32
      %v1057 = vpop.permute.xlu0 %1056
      %1058 = vrot.lane.b32.xlu0 %v969, 32
      %v1059 = vpop.permute.xlu0 %1058
      %1060 = vrot.lane.b32.xlu0 %v972, 32
      %v1061 = vpop.permute.xlu0 %1060
      %1062 = vrot.lane.b32.xlu0 %v975, 32
      %v1063 = vpop.permute.xlu0 %1062
      %1064 = vrot.lane.b32.xlu0 %v978, 32
      %v1065 = vpop.permute.xlu0 %1064
      %1066 = vrot.lane.b32.xlu0 %v981, 32
      %v1067 = vpop.permute.xlu0 %1066
      %1068 = vrot.lane.b32.xlu0 %v984, 32
      %v1069 = vpop.permute.xlu0 %1068
      %1070 = vrot.lane.b32.xlu0 %v987, 32
      %v1071 = vpop.permute.xlu0 %1070
      %1072 = vrot.lane.b32.xlu0 %v990, 32
      %v1073 = vpop.permute.xlu0 %1072
      %1074 = vrot.lane.b32.xlu0 %v993, 32
      %v1075 = vpop.permute.xlu0 %1074
      %1076 = vrot.lane.b32.xlu0 %v996, 32
      %v1077 = vpop.permute.xlu0 %1076
      %1078 = vrot.lane.b32.xlu0 %v690, 48
      %v1079 = vpop.permute.xlu0 %1078
      %1080 = vrot.lane.b32.xlu0 %v691, 48
      %v1081 = vpop.permute.xlu0 %1080
      %1082 = vrot.lane.b32.xlu0 %v692, 48
      %v1083 = vpop.permute.xlu0 %1082
      %1084 = vrot.lane.b32.xlu0 %v693, 48
      %v1085 = vpop.permute.xlu0 %1084
      %1086 = vrot.lane.b32.xlu0 %v694, 48
      %v1087 = vpop.permute.xlu0 %1086
      %1088 = vrot.lane.b32.xlu0 %v695, 48
      %v1089 = vpop.permute.xlu0 %1088
      %1090 = vrot.lane.b32.xlu0 %v696, 48
      %v1091 = vpop.permute.xlu0 %1090
      %1092 = vrot.lane.b32.xlu0 %v697, 48
      %v1093 = vpop.permute.xlu0 %1092
      %1094 = vrot.lane.b32.xlu0 %v698, 48
      %v1095 = vpop.permute.xlu0 %1094
      %1096 = vrot.lane.b32.xlu0 %v699, 48
      %v1097 = vpop.permute.xlu0 %1096
      %1098 = vrot.lane.b32.xlu0 %v700, 48
      %v1099 = vpop.permute.xlu0 %1098
      %1100 = vrot.lane.b32.xlu0 %v701, 48
      %v1101 = vpop.permute.xlu0 %1100
      %1102 = vrot.lane.b32.xlu0 %v702, 48
      %v1103 = vpop.permute.xlu0 %1102
      %1104 = vrot.lane.b32.xlu0 %v703, 48
      %v1105 = vpop.permute.xlu0 %1104
      %1106 = vrot.lane.b32.xlu0 %v704, 48
      %v1107 = vpop.permute.xlu0 %1106
      %1108 = vrot.lane.b32.xlu0 %v705, 48
      %v1109 = vpop.permute.xlu0 %1108
      %1110 = vrot.lane.b32.xlu0 %v747, 64
      %v1111 = vpop.permute.xlu0 %1110
      %1112 = vrot.lane.b32.xlu0 %v759, 64
      %v1113 = vpop.permute.xlu0 %1112
      %1114 = vrot.lane.b32.xlu0 %v771, 64
      %v1115 = vpop.permute.xlu0 %1114
      %1116 = vrot.lane.b32.xlu0 %v783, 64
      %v1117 = vpop.permute.xlu0 %1116
      %1118 = vrot.lane.b32.xlu0 %v795, 64
      %v1119 = vpop.permute.xlu0 %1118
      %1120 = vrot.lane.b32.xlu0 %v807, 64
      %v1121 = vpop.permute.xlu0 %1120
      %1122 = vrot.lane.b32.xlu0 %v819, 64
      %v1123 = vpop.permute.xlu0 %1122
      %1124 = vrot.lane.b32.xlu0 %v831, 64
      %v1125 = vpop.permute.xlu0 %1124
      %1126 = vrot.lane.b32.xlu0 %v843, 64
      %v1127 = vpop.permute.xlu0 %1126
      %1128 = vrot.lane.b32.xlu0 %v855, 64
      %v1129 = vpop.permute.xlu0 %1128
      %1130 = vrot.lane.b32.xlu0 %v867, 64
      %v1131 = vpop.permute.xlu0 %1130
      %1132 = vrot.lane.b32.xlu0 %v879, 64
      %v1133 = vpop.permute.xlu0 %1132
      %1134 = vrot.lane.b32.xlu0 %v891, 64
      %v1135 = vpop.permute.xlu0 %1134
      %1136 = vrot.lane.b32.xlu0 %v903, 64
      %v1137 = vpop.permute.xlu0 %1136
      %1138 = vrot.lane.b32.xlu0 %v915, 64
      %v1139 = vpop.permute.xlu0 %1138
      %1140 = vrot.lane.b32.xlu0 %v1008, 64
      %v1141 = vpop.permute.xlu0 %1140
      %1142 = vrot.lane.b32.xlu0 %v954, 80
      %v1143 = vpop.permute.xlu0 %1142
      %1144 = vrot.lane.b32.xlu0 %v957, 80
      %v1145 = vpop.permute.xlu0 %1144
      %1146 = vrot.lane.b32.xlu0 %v960, 80
      %v1147 = vpop.permute.xlu0 %1146
      %1148 = vrot.lane.b32.xlu0 %v963, 80
      %v1149 = vpop.permute.xlu0 %1148
      %1150 = vrot.lane.b32.xlu0 %v966, 80
      %v1151 = vpop.permute.xlu0 %1150
      %1152 = vrot.lane.b32.xlu0 %v969, 80
      %v1153 = vpop.permute.xlu0 %1152
      %1154 = vrot.lane.b32.xlu0 %v972, 80
      %v1155 = vpop.permute.xlu0 %1154
      %1156 = vrot.lane.b32.xlu0 %v975, 80
      %v1157 = vpop.permute.xlu0 %1156
      %1158 = vrot.lane.b32.xlu0 %v978, 80
      %v1159 = vpop.permute.xlu0 %1158
      %1160 = vrot.lane.b32.xlu0 %v981, 80
      %v1161 = vpop.permute.xlu0 %1160
      %1162 = vrot.lane.b32.xlu0 %v984, 80
      %v1163 = vpop.permute.xlu0 %1162
      %1164 = vrot.lane.b32.xlu0 %v987, 80
      %v1165 = vpop.permute.xlu0 %1164
      %1166 = vrot.lane.b32.xlu0 %v990, 80
      %v1167 = vpop.permute.xlu0 %1166
      %1168 = vrot.lane.b32.xlu0 %v993, 80
      %v1169 = vpop.permute.xlu0 %1168
      %1170 = vrot.lane.b32.xlu0 %v996, 80
      %v1171 = vpop.permute.xlu0 %1170
      %1172 = vrot.lane.b32.xlu0 %v1013, 80
      %v1173 = vpop.permute.xlu0 %1172
      %1174 = vrot.lane.b32.xlu0 %v691, 96
      %v1175 = vpop.permute.xlu0 %1174
      %1176 = vrot.lane.b32.xlu0 %v692, 96
      %v1177 = vpop.permute.xlu0 %1176
      %1178 = vrot.lane.b32.xlu0 %v693, 96
      %v1179 = vpop.permute.xlu0 %1178
      %1180 = vrot.lane.b32.xlu0 %v694, 96
      %v1181 = vpop.permute.xlu0 %1180
      %1182 = vrot.lane.b32.xlu0 %v695, 96
      %v1183 = vpop.permute.xlu0 %1182
      %1184 = vrot.lane.b32.xlu0 %v696, 96
      %v1185 = vpop.permute.xlu0 %1184
      %1186 = vrot.lane.b32.xlu0 %v697, 96
      %v1187 = vpop.permute.xlu0 %1186
      %1188 = vrot.lane.b32.xlu0 %v698, 96
      %v1189 = vpop.permute.xlu0 %1188
      %1190 = vrot.lane.b32.xlu0 %v699, 96
      %v1191 = vpop.permute.xlu0 %1190
      %1192 = vrot.lane.b32.xlu0 %v700, 96
      %v1193 = vpop.permute.xlu0 %1192
      %1194 = vrot.lane.b32.xlu0 %v701, 96
      %v1195 = vpop.permute.xlu0 %1194
      %1196 = vrot.lane.b32.xlu0 %v702, 96
      %v1197 = vpop.permute.xlu0 %1196
      %1198 = vrot.lane.b32.xlu0 %v703, 96
      %v1199 = vpop.permute.xlu0 %1198
      %1200 = vrot.lane.b32.xlu0 %v704, 96
      %v1201 = vpop.permute.xlu0 %1200
      %1202 = vrot.lane.b32.xlu0 %v705, 96
      %v1203 = vpop.permute.xlu0 %1202
      %1204 = vrot.lane.b32.xlu0 %v689, 96
      %v1205 = vpop.permute.xlu0 %1204
      %1206 = vrot.lane.b32.xlu0 %v759, 112
      %v1207 = vpop.permute.xlu0 %1206
      %1208 = vrot.lane.b32.xlu0 %v771, 112
      %v1209 = vpop.permute.xlu0 %1208
      %1210 = vrot.lane.b32.xlu0 %v783, 112
      %v1211 = vpop.permute.xlu0 %1210
      %1212 = vrot.lane.b32.xlu0 %v795, 112
      %v1213 = vpop.permute.xlu0 %1212
      %1214 = vrot.lane.b32.xlu0 %v807, 112
      %v1215 = vpop.permute.xlu0 %1214
      %1216 = vrot.lane.b32.xlu0 %v819, 112
      %v1217 = vpop.permute.xlu0 %1216
      %1218 = vrot.lane.b32.xlu0 %v831, 112
      %v1219 = vpop.permute.xlu0 %1218
      %1220 = vrot.lane.b32.xlu0 %v843, 112
      %v1221 = vpop.permute.xlu0 %1220
      %1222 = vrot.lane.b32.xlu0 %v855, 112
      %v1223 = vpop.permute.xlu0 %1222
      %1224 = vrot.lane.b32.xlu0 %v867, 112
      %v1225 = vpop.permute.xlu0 %1224
      %1226 = vrot.lane.b32.xlu0 %v879, 112
      %v1227 = vpop.permute.xlu0 %1226
      %1228 = vrot.lane.b32.xlu0 %v891, 112
      %v1229 = vpop.permute.xlu0 %1228
      %1230 = vrot.lane.b32.xlu0 %v903, 112
      %v1231 = vpop.permute.xlu0 %1230
      %1232 = vrot.lane.b32.xlu0 %v915, 112
      %v1233 = vpop.permute.xlu0 %1232
      %1234 = vrot.lane.b32.xlu0 %v1008, 112
      %v1235 = vpop.permute.xlu0 %1234
      %1236 = vrot.lane.b32.xlu0 %v735, 112
      %v1237 = vpop.permute.xlu0 %1236
      %vm1238 = vcmask 130048
      %v1240 = vsel %vm1238, %v689, %v1015
      %v1242 = vsel %vm1238, %v690, %v1017
      %v1244 = vsel %vm1238, %v691, %v1019
      %v1246 = vsel %vm1238, %v692, %v1021
      %v1248 = vsel %vm1238, %v693, %v1023
      %v1250 = vsel %vm1238, %v694, %v1025
      %v1252 = vsel %vm1238, %v695, %v1027
      %v1254 = vsel %vm1238, %v696, %v1029
      %v1256 = vsel %vm1238, %v697, %v1031
      %v1258 = vsel %vm1238, %v698, %v1033
      %v1260 = vsel %vm1238, %v699, %v1035
      %v1262 = vsel %vm1238, %v700, %v1037
      %v1264 = vsel %vm1238, %v701, %v1039
      %v1266 = vsel %vm1238, %v702, %v1041
      %v1268 = vsel %vm1238, %v703, %v1043
      %v1270 = vsel %vm1238, %v704, %v1045
      %vm1271 = vcmask 261120
      %v1273 = vsel %vm1271, %v1240, %v1047
      %v1275 = vsel %vm1271, %v1242, %v1049
      %v1277 = vsel %vm1271, %v1244, %v1051
      %v1279 = vsel %vm1271, %v1246, %v1053
      %v1281 = vsel %vm1271, %v1248, %v1055
      %v1283 = vsel %vm1271, %v1250, %v1057
      %v1285 = vsel %vm1271, %v1252, %v1059
      %v1287 = vsel %vm1271, %v1254, %v1061
      %v1289 = vsel %vm1271, %v1256, %v1063
      %v1291 = vsel %vm1271, %v1258, %v1065
      %v1293 = vsel %vm1271, %v1260, %v1067
      %v1295 = vsel %vm1271, %v1262, %v1069
      %v1297 = vsel %vm1271, %v1264, %v1071
      %v1299 = vsel %vm1271, %v1266, %v1073
      %v1301 = vsel %vm1271, %v1268, %v1075
      %v1303 = vsel %vm1271, %v1270, %v1077
      %vm1304 = vcmask 392192
      %v1306 = vsel %vm1304, %v1273, %v1079
      %v1308 = vsel %vm1304, %v1275, %v1081
      %v1310 = vsel %vm1304, %v1277, %v1083
      %v1312 = vsel %vm1304, %v1279, %v1085
      %v1314 = vsel %vm1304, %v1281, %v1087
      %v1316 = vsel %vm1304, %v1283, %v1089
      %v1318 = vsel %vm1304, %v1285, %v1091
      %v1320 = vsel %vm1304, %v1287, %v1093
      %v1322 = vsel %vm1304, %v1289, %v1095
      %v1324 = vsel %vm1304, %v1291, %v1097
      %v1326 = vsel %vm1304, %v1293, %v1099
      %v1328 = vsel %vm1304, %v1295, %v1101
      %v1330 = vsel %vm1304, %v1297, %v1103
      %v1332 = vsel %vm1304, %v1299, %v1105
      %v1334 = vsel %vm1304, %v1301, %v1107
      %v1336 = vsel %vm1304, %v1303, %v1109
      %vm1337 = vcmask 523264
      %v1339 = vsel %vm1337, %v1306, %v1111
      %v1341 = vsel %vm1337, %v1308, %v1113
      %v1343 = vsel %vm1337, %v1310, %v1115
      %v1345 = vsel %vm1337, %v1312, %v1117
      %v1347 = vsel %vm1337, %v1314, %v1119
      %v1349 = vsel %vm1337, %v1316, %v1121
      %v1351 = vsel %vm1337, %v1318, %v1123
      %v1353 = vsel %vm1337, %v1320, %v1125
      %v1355 = vsel %vm1337, %v1322, %v1127
      %v1357 = vsel %vm1337, %v1324, %v1129
      %v1359 = vsel %vm1337, %v1326, %v1131
      %v1361 = vsel %vm1337, %v1328, %v1133
      %v1363 = vsel %vm1337, %v1330, %v1135
      %v1365 = vsel %vm1337, %v1332, %v1137
      %v1367 = vsel %vm1337, %v1334, %v1139
      %v1369 = vsel %vm1337, %v1336, %v1141
      %vm1370 = vcmask 654336
      %v1372 = vsel %vm1370, %v1339, %v1143
      %v1374 = vsel %vm1370, %v1341, %v1145
      %v1376 = vsel %vm1370, %v1343, %v1147
      %v1378 = vsel %vm1370, %v1345, %v1149
      %v1380 = vsel %vm1370, %v1347, %v1151
      %v1382 = vsel %vm1370, %v1349, %v1153
      %v1384 = vsel %vm1370, %v1351, %v1155
      %v1386 = vsel %vm1370, %v1353, %v1157
      %v1388 = vsel %vm1370, %v1355, %v1159
      %v1390 = vsel %vm1370, %v1357, %v1161
      %v1392 = vsel %vm1370, %v1359, %v1163
      %v1394 = vsel %vm1370, %v1361, %v1165
      %v1396 = vsel %vm1370, %v1363, %v1167
      %v1398 = vsel %vm1370, %v1365, %v1169
      %v1400 = vsel %vm1370, %v1367, %v1171
      %v1402 = vsel %vm1370, %v1369, %v1173
      %vm1403 = vcmask 785408
      %v1405 = vsel %vm1403, %v1372, %v1175
      %v1407 = vsel %vm1403, %v1374, %v1177
      %v1409 = vsel %vm1403, %v1376, %v1179
      %v1411 = vsel %vm1403, %v1378, %v1181
      %v1413 = vsel %vm1403, %v1380, %v1183
      %v1415 = vsel %vm1403, %v1382, %v1185
      %v1417 = vsel %vm1403, %v1384, %v1187
      %v1419 = vsel %vm1403, %v1386, %v1189
      %v1421 = vsel %vm1403, %v1388, %v1191
      %v1423 = vsel %vm1403, %v1390, %v1193
      %v1425 = vsel %vm1403, %v1392, %v1195
      %v1427 = vsel %vm1403, %v1394, %v1197
      %v1429 = vsel %vm1403, %v1396, %v1199
      %v1431 = vsel %vm1403, %v1398, %v1201
      %v1433 = vsel %vm1403, %v1400, %v1203
      %v1435 = vsel %vm1403, %v1402, %v1205
      %vm1436 = vcmask 916480
      %v1438 = vsel %vm1436, %v1405, %v1207
      %v1441 = vsel %vm1436, %v1407, %v1209
      %v1444 = vsel %vm1436, %v1409, %v1211
      %v1447 = vsel %vm1436, %v1411, %v1213
      %v1450 = vsel %vm1436, %v1413, %v1215
      %v1453 = vsel %vm1436, %v1415, %v1217
      %v1456 = vsel %vm1436, %v1417, %v1219
      %v1459 = vsel %vm1436, %v1419, %v1221
      %v1462 = vsel %vm1436, %v1421, %v1223
      %v1465 = vsel %vm1436, %v1423, %v1225
      %v1468 = vsel %vm1436, %v1425, %v1227
      %v1471 = vsel %vm1436, %v1427, %v1229
      %v1474 = vsel %vm1436, %v1429, %v1231
      %v1477 = vsel %vm1436, %v1431, %v1233
      %v1480 = vsel %vm1436, %v1433, %v1235
      %v1483 = vsel %vm1436, %v1435, %v1237
      %v1486 = vlaneseq
      %v1487 = vshrl.u32 %v1486, 7
      %v1488 = vsub.s32 0, %v1487
      %v1489 = vrot.slane %v516, %v1488
      %v1509 = vunpack.c.l.b16 %v498
      %v1510 = vunpack.c.l.b16 %v499
      %v1511 = vunpack.c.l.b16 %v500
      %v1512 = vunpack.c.l.b16 %v501
      %v1513 = vunpack.c.l.b16 %v502
      %v1514 = vunpack.c.l.b16 %v503
      %v1515 = vunpack.c.l.b16 %v504
      %v1516 = vunpack.c.l.b16 %v505
      %v1517 = vunpack.c.l.b16 %v506
      %v1518 = vunpack.c.l.b16 %v507
      %v1519 = vunpack.c.l.b16 %v508
      %v1520 = vunpack.c.l.b16 %v509
      %v1521 = vunpack.c.l.b16 %v510
      %v1522 = vunpack.c.l.b16 %v511
      %v1523 = vunpack.c.l.b16 %v512
      %v1524 = vunpack.c.l.b16 %v513
      %v1525 = vunpack.c.l.b16 %v514
      %v1526 = vunpack.c.l.b16 %v515
      %v1527 = vpack.c.b16 %v1510, %v1509
      %v1528 = vpack.c.b16 %v1512, %v1511
      %v1529 = vpack.c.b16 %v1514, %v1513
      %v1530 = vpack.c.b16 %v1516, %v1515
      %v1531 = vpack.c.b16 %v1518, %v1517
      %v1532 = vpack.c.b16 %v1520, %v1519
      %v1533 = vpack.c.b16 %v1522, %v1521
      %v1534 = vpack.c.b16 %v1524, %v1523
      %v1535 = vpack.c.b16 %v1526, %v1525
      %v1546 = vsel %vm1238, %v957, 0
      %v1549 = vsel %vm1238, %v960, 0
      %v1552 = vsel %vm1238, %v963, 0
      %v1555 = vsel %vm1238, %v966, 0
      %v1558 = vsel %vm1238, %v969, 0
      %v1561 = vsel %vm1238, %v972, 0
      %v1564 = vsel %vm1238, %v975, 0
      %v1567 = vsel %vm1238, %v978, 0
      %v1570 = vsel %vm1238, %v981, 0
      %v1573 = vsel %vm1238, %v984, 0
      %v1576 = vsel %vm1238, %v987, 0
      %v1579 = vsel %vm1238, %v990, 0
      %v1582 = vsel %vm1238, %v993, 0
      %v1585 = vsel %vm1238, %v996, 0
      %v1588 = vsel %vm1238, %v1013, 0
      %v1591 = vsel %vm1238, %v951, 0
      %1593 = vmatprep.subr.bf16.mxu0 0
      %1594 = vmatpush1.bf16.msra.mxu0 %v1527
      %1595 = vmatprep.subr.bf16.mxu0 0
      %1596 = vmatpush1.bf16.msra.mxu0 %v1528
      %1597 = vmatprep.subr.bf16.mxu0 0
      %1598 = vmatpush1.bf16.msra.mxu0 %v1529
      %1599 = vmatprep.subr.bf16.mxu0 0
      %1600 = vmatpush1.bf16.msra.mxu0 %v1530
      %1601 = vmatprep.subr.bf16.mxu0 0
      %1602 = vmatpush1.bf16.msra.mxu0 %v1531
      %1603 = vmatprep.subr.bf16.mxu0 0
      %1604 = vmatpush1.bf16.msra.mxu0 %v1532
      %1605 = vmatprep.subr.bf16.mxu0 0
      %1606 = vmatpush1.bf16.msra.mxu0 %v1533
      %1607 = vmatprep.subr.bf16.mxu0 0
      %1608 = vmatpush1.bf16.msra.mxu0 %v1534
      %1609 = vmatprep.subr.bf16.mxu0 0
      %1610 = vmatpush1.bf16.msra.mxu0 %v1535
      %1611 = vmatprep.subr.bf16.mxu0 0
      %1612 = vmatpush1.bf16.msra.mxu0 0
      %1613 = vmatprep.subr.bf16.mxu0 0
      %1614 = vmatpush1.bf16.msra.mxu0 0
      %1615 = vmatprep.subr.bf16.mxu0 0
      %1616 = vmatpush1.bf16.msra.mxu0 0
      %1617 = vmatprep.subr.bf16.mxu0 0
      %1618 = vmatpush1.bf16.msra.mxu0 0
      %1619 = vmatprep.subr.bf16.mxu0 0
      %1620 = vmatpush1.bf16.msra.mxu0 0
      %1621 = vmatprep.subr.bf16.mxu0 0
      %1622 = vmatpush1.bf16.msra.mxu0 0
      %1623 = vmatprep.subr.bf16.mxu0 0
      %1624 = vmatpush1.bf16.msra.mxu0 0
      %1625 = vmatprep.mubr.bf16.mxu0 %v1546
      %1626 = vmatmul.mubr.bf16.gmra.mrb[0].mxu0 %v1438
      %v1627 = vpop.f32.mrb[0].mxu0
      %v1628 = vadd.f32 %v1489, %v1627
      %v1629 = vpop.f32.mrb[0].mxu0
      %v1630 = vpop.f32.mrb[0].mxu0
      %v1631 = vadd.f32 %v1489, %v1630
      %v1632 = vpop.f32.mrb[0].mxu0
      %1633 = vmatprep.mubr.bf16.mxu0 %v1549
      %1634 = vmatmul.mubr.bf16.gmra.mrb[0].mxu0 %v1441
      %v1635 = vpop.f32.mrb[0].mxu0
      %v1636 = vadd.f32 %v1489, %v1635
      %v1637 = vpop.f32.mrb[0].mxu0
      %v1638 = vpop.f32.mrb[0].mxu0
      %v1639 = vadd.f32 %v1489, %v1638
      %v1640 = vpop.f32.mrb[0].mxu0
      %1641 = vmatprep.mubr.bf16.mxu0 %v1552
      %1642 = vmatmul.mubr.bf16.gmra.mrb[0].mxu0 %v1444
      %v1643 = vpop.f32.mrb[0].mxu0
      %v1644 = vadd.f32 %v1489, %v1643
      %v1645 = vpop.f32.mrb[0].mxu0
      %v1646 = vpop.f32.mrb[0].mxu0
      %v1647 = vadd.f32 %v1489, %v1646
      %v1648 = vpop.f32.mrb[0].mxu0
      %1649 = vmatprep.mubr.bf16.mxu0 %v1555
      %1650 = vmatmul.mubr.bf16.gmra.mrb[0].mxu0 %v1447
      %v1651 = vpop.f32.mrb[0].mxu0
      %v1652 = vadd.f32 %v1489, %v1651
      %v1653 = vpop.f32.mrb[0].mxu0
      %v1654 = vpop.f32.mrb[0].mxu0
      %v1655 = vadd.f32 %v1489, %v1654
      %v1656 = vpop.f32.mrb[0].mxu0
      %1657 = vmatprep.mubr.bf16.mxu0 %v1558
      %1658 = vmatmul.mubr.bf16.gmra.mrb[0].mxu0 %v1450
      %v1659 = vpop.f32.mrb[0].mxu0
      %v1660 = vadd.f32 %v1489, %v1659
      %v1661 = vpop.f32.mrb[0].mxu0
      %v1662 = vpop.f32.mrb[0].mxu0
      %v1663 = vadd.f32 %v1489, %v1662
      %v1664 = vpop.f32.mrb[0].mxu0
      %1665 = vmatprep.mubr.bf16.mxu0 %v1561
      %1666 = vmatmul.mubr.bf16.gmra.mrb[0].mxu0 %v1453
      %v1667 = vpop.f32.mrb[0].mxu0
      %v1668 = vadd.f32 %v1489, %v1667
      %v1669 = vpop.f32.mrb[0].mxu0
      %v1670 = vpop.f32.mrb[0].mxu0
      %v1671 = vadd.f32 %v1489, %v1670
      %v1672 = vpop.f32.mrb[0].mxu0
      %1673 = vmatprep.mubr.bf16.mxu0 %v1564
      %1674 = vmatmul.mubr.bf16.gmra.mrb[0].mxu0 %v1456
      %v1675 = vpop.f32.mrb[0].mxu0
      %v1676 = vadd.f32 %v1489, %v1675
      %v1677 = vpop.f32.mrb[0].mxu0
      %v1678 = vpop.f32.mrb[0].mxu0
      %v1679 = vadd.f32 %v1489, %v1678
      %v1680 = vpop.f32.mrb[0].mxu0
      %1681 = vmatprep.mubr.bf16.mxu0 %v1567
      %1682 = vmatmul.mubr.bf16.gmra.mrb[0].mxu0 %v1459
      %v1683 = vpop.f32.mrb[0].mxu0
      %v1684 = vadd.f32 %v1489, %v1683
      %v1685 = vpop.f32.mrb[0].mxu0
      %v1686 = vpop.f32.mrb[0].mxu0
      %v1687 = vadd.f32 %v1489, %v1686
      %v1688 = vpop.f32.mrb[0].mxu0
      %1689 = vmatprep.mubr.bf16.mxu0 %v1570
      %1690 = vmatmul.mubr.bf16.gmra.mrb[0].mxu0 %v1462
      %v1691 = vpop.f32.mrb[0].mxu0
      %v1692 = vadd.f32 %v1489, %v1691
      %v1693 = vpop.f32.mrb[0].mxu0
      %v1694 = vpop.f32.mrb[0].mxu0
      %v1695 = vadd.f32 %v1489, %v1694
      %v1696 = vpop.f32.mrb[0].mxu0
      %1697 = vmatprep.mubr.bf16.mxu0 %v1573
      %1698 = vmatmul.mubr.bf16.gmra.mrb[0].mxu0 %v1465
      %v1699 = vpop.f32.mrb[0].mxu0
      %v1700 = vadd.f32 %v1489, %v1699
      %v1701 = vpop.f32.mrb[0].mxu0
      %v1702 = vpop.f32.mrb[0].mxu0
      %v1703 = vadd.f32 %v1489, %v1702
      %v1704 = vpop.f32.mrb[0].mxu0
      %1705 = vmatprep.mubr.bf16.mxu0 %v1576
      %1706 = vmatmul.mubr.bf16.gmra.mrb[0].mxu0 %v1468
      %v1707 = vpop.f32.mrb[0].mxu0
      %v1708 = vadd.f32 %v1489, %v1707
      %v1709 = vpop.f32.mrb[0].mxu0
      %v1710 = vpop.f32.mrb[0].mxu0
      %v1711 = vadd.f32 %v1489, %v1710
      %v1712 = vpop.f32.mrb[0].mxu0
      %1713 = vmatprep.mubr.bf16.mxu0 %v1579
      %1714 = vmatmul.mubr.bf16.gmra.mrb[0].mxu0 %v1471
      %v1715 = vpop.f32.mrb[0].mxu0
      %v1716 = vadd.f32 %v1489, %v1715
      %v1717 = vpop.f32.mrb[0].mxu0
      %v1718 = vpop.f32.mrb[0].mxu0
      %v1719 = vadd.f32 %v1489, %v1718
      %v1720 = vpop.f32.mrb[0].mxu0
      %1721 = vmatprep.mubr.bf16.mxu0 %v1582
      %1722 = vmatmul.mubr.bf16.gmra.mrb[0].mxu0 %v1474
      %v1723 = vpop.f32.mrb[0].mxu0
      %v1724 = vadd.f32 %v1489, %v1723
      %v1725 = vpop.f32.mrb[0].mxu0
      %v1726 = vpop.f32.mrb[0].mxu0
      %v1727 = vadd.f32 %v1489, %v1726
      %v1728 = vpop.f32.mrb[0].mxu0
      %1729 = vmatprep.mubr.bf16.mxu0 %v1585
      %1730 = vmatmul.mubr.bf16.gmra.mrb[0].mxu0 %v1477
      %v1731 = vpop.f32.mrb[0].mxu0
      %v1732 = vadd.f32 %v1489, %v1731
      %v1733 = vpop.f32.mrb[0].mxu0
      %v1734 = vpop.f32.mrb[0].mxu0
      %v1735 = vadd.f32 %v1489, %v1734
      %v1736 = vpop.f32.mrb[0].mxu0
      %1737 = vmatprep.mubr.bf16.mxu0 %v1588
      %1738 = vmatmul.mubr.bf16.gmra.mrb[0].mxu0 %v1480
      %v1739 = vpop.f32.mrb[0].mxu0
      %v1740 = vadd.f32 %v1489, %v1739
      %v1741 = vpop.f32.mrb[0].mxu0
      %v1742 = vpop.f32.mrb[0].mxu0
      %v1743 = vadd.f32 %v1489, %v1742
      %v1744 = vpop.f32.mrb[0].mxu0
      %1745 = vmatprep.mubr.bf16.mxu0 %v1591
      %1746 = vmatmul.mubr.bf16.gmra.mrb[0].mxu0 %v1483
      %v1747 = vpop.f32.mrb[0].mxu0
      %v1748 = vadd.f32 %v1489, %v1747
      %v1749 = vpop.f32.mrb[0].mxu0
      %v1750 = vpop.f32.mrb[0].mxu0
      %v1751 = vadd.f32 %v1489, %v1750
      %v1752 = vpop.f32.mrb[0].mxu0
      %1753 = vdwg.mxu0
      %vm1754 = vcmp.ge.f32.partialorder %v1628, 0.0
      %vm1755 = vcmp.ge.f32.partialorder %v1631, 0.0
      %vm1756 = vcmp.ge.f32.partialorder %v1636, 0.0
      %vm1757 = vcmp.ge.f32.partialorder %v1639, 0.0
      %vm1758 = vcmp.ge.f32.partialorder %v1644, 0.0
      %vm1759 = vcmp.ge.f32.partialorder %v1647, 0.0
      %vm1760 = vcmp.ge.f32.partialorder %v1652, 0.0
      %vm1761 = vcmp.ge.f32.partialorder %v1655, 0.0
      %vm1762 = vcmp.ge.f32.partialorder %v1660, 0.0
      %vm1763 = vcmp.ge.f32.partialorder %v1663, 0.0
      %vm1764 = vcmp.ge.f32.partialorder %v1668, 0.0
      %vm1765 = vcmp.ge.f32.partialorder %v1671, 0.0
      %vm1766 = vcmp.ge.f32.partialorder %v1676, 0.0
      %vm1767 = vcmp.ge.f32.partialorder %v1679, 0.0
      %vm1768 = vcmp.ge.f32.partialorder %v1684, 0.0
      %vm1769 = vcmp.ge.f32.partialorder %v1687, 0.0
      %vm1770 = vcmp.ge.f32.partialorder %v1692, 0.0
      %vm1771 = vcmp.ge.f32.partialorder %v1695, 0.0
      %vm1772 = vcmp.ge.f32.partialorder %v1700, 0.0
      %vm1773 = vcmp.ge.f32.partialorder %v1703, 0.0
      %vm1774 = vcmp.ge.f32.partialorder %v1708, 0.0
      %vm1775 = vcmp.ge.f32.partialorder %v1711, 0.0
      %vm1776 = vcmp.ge.f32.partialorder %v1716, 0.0
      %vm1777 = vcmp.ge.f32.partialorder %v1719, 0.0
      %vm1778 = vcmp.ge.f32.partialorder %v1724, 0.0
      %vm1779 = vcmp.ge.f32.partialorder %v1727, 0.0
      %vm1780 = vcmp.ge.f32.partialorder %v1732, 0.0
      %vm1781 = vcmp.ge.f32.partialorder %v1735, 0.0
      %vm1782 = vcmp.ge.f32.partialorder %v1740, 0.0
      %vm1783 = vcmp.ge.f32.partialorder %v1743, 0.0
      %vm1784 = vcmp.ge.f32.partialorder %v1748, 0.0
      %vm1785 = vcmp.ge.f32.partialorder %v1751, 0.0
      %v1786 = vmul.f32 %v1628, 0.1
      %v1787 = vmul.f32 %v1631, 0.1
      %v1788 = vmul.f32 %v1636, 0.1
      %v1789 = vmul.f32 %v1639, 0.1
      %v1790 = vmul.f32 %v1644, 0.1
      %v1791 = vmul.f32 %v1647, 0.1
      %v1792 = vmul.f32 %v1652, 0.1
      %v1793 = vmul.f32 %v1655, 0.1
      %v1794 = vmul.f32 %v1660, 0.1
      %v1795 = vmul.f32 %v1663, 0.1
      %v1796 = vmul.f32 %v1668, 0.1
      %v1797 = vmul.f32 %v1671, 0.1
      %v1798 = vmul.f32 %v1676, 0.1
      %v1799 = vmul.f32 %v1679, 0.1
      %v1800 = vmul.f32 %v1684, 0.1
      %v1801 = vmul.f32 %v1687, 0.1
      %v1802 = vmul.f32 %v1692, 0.1
      %v1803 = vmul.f32 %v1695, 0.1
      %v1804 = vmul.f32 %v1700, 0.1
      %v1805 = vmul.f32 %v1703, 0.1
      %v1806 = vmul.f32 %v1708, 0.1
      %v1807 = vmul.f32 %v1711, 0.1
      %v1808 = vmul.f32 %v1716, 0.1
      %v1809 = vmul.f32 %v1719, 0.1
      %v1810 = vmul.f32 %v1724, 0.1
      %v1811 = vmul.f32 %v1727, 0.1
      %v1812 = vmul.f32 %v1732, 0.1
      %v1813 = vmul.f32 %v1735, 0.1
      %v1814 = vmul.f32 %v1740, 0.1
      %v1815 = vmul.f32 %v1743, 0.1
      %v1816 = vmul.f32 %v1748, 0.1
      %v1817 = vmul.f32 %v1751, 0.1
      %v1818 = vsel %vm1754, %v1628, %v1786
      %v1819 = vsel %vm1755, %v1631, %v1787
      %v1820 = vsel %vm1756, %v1636, %v1788
      %v1821 = vsel %vm1757, %v1639, %v1789
      %v1822 = vsel %vm1758, %v1644, %v1790
      %v1823 = vsel %vm1759, %v1647, %v1791
      %v1824 = vsel %vm1760, %v1652, %v1792
      %v1825 = vsel %vm1761, %v1655, %v1793
      %v1826 = vsel %vm1762, %v1660, %v1794
      %v1827 = vsel %vm1763, %v1663, %v1795
      %v1828 = vsel %vm1764, %v1668, %v1796
      %v1829 = vsel %vm1765, %v1671, %v1797
      %v1830 = vsel %vm1766, %v1676, %v1798
      %v1831 = vsel %vm1767, %v1679, %v1799
      %v1832 = vsel %vm1768, %v1684, %v1800
      %v1833 = vsel %vm1769, %v1687, %v1801
      %v1834 = vsel %vm1770, %v1692, %v1802
      %v1835 = vsel %vm1771, %v1695, %v1803
      %v1836 = vsel %vm1772, %v1700, %v1804
      %v1837 = vsel %vm1773, %v1703, %v1805
      %v1838 = vsel %vm1774, %v1708, %v1806
      %v1839 = vsel %vm1775, %v1711, %v1807
      %v1840 = vsel %vm1776, %v1716, %v1808
      %v1841 = vsel %vm1777, %v1719, %v1809
      %v1842 = vsel %vm1778, %v1724, %v1810
      %v1843 = vsel %vm1779, %v1727, %v1811
      %v1844 = vsel %vm1780, %v1732, %v1812
      %v1845 = vsel %vm1781, %v1735, %v1813
      %v1846 = vsel %vm1782, %v1740, %v1814
      %v1847 = vsel %vm1783, %v1743, %v1815
      %v1848 = vsel %vm1784, %v1748, %v1816
      %v1849 = vsel %vm1785, %v1751, %v1817
      %v1850 = vld [vmem:[%s4] sm:$0xf]
      %v1851 = vld [vmem:[%s4 + $0x4] sm:$0xf]
      %v1852 = vld [vmem:[%s4 + $0x8] sm:$0xf]
      %v1853 = vld [vmem:[%s4 + $0xc] sm:$0xf]
      %v1854 = vld [vmem:[%s4 + $0x10] sm:$0xf]
      %v1855 = vld [vmem:[%s4 + $0x14] sm:$0xf]
      %v1856 = vld [vmem:[%s4 + $0x18] sm:$0xf]
      %v1857 = vld [vmem:[%s4 + $0x1c] sm:$0xf]
      %v1858 = vld [vmem:[%s4 + $0x20] sm:$0xf]
      %v1859 = vld [vmem:[%s5] sm:$0x1]
      %v1860 = vpack.c.bf16 %v1819, %v1818
      %v1861 = vpack.c.bf16 %v1821, %v1820
      %v1862 = vpack.c.bf16 %v1823, %v1822
      %v1863 = vpack.c.bf16 %v1825, %v1824
      %v1864 = vpack.c.bf16 %v1827, %v1826
      %v1865 = vpack.c.bf16 %v1829, %v1828
      %v1866 = vpack.c.bf16 %v1831, %v1830
      %v1867 = vpack.c.bf16 %v1833, %v1832
      %v1868 = vpack.c.bf16 %v1835, %v1834
      %v1869 = vpack.c.bf16 %v1837, %v1836
      %v1870 = vpack.c.bf16 %v1839, %v1838
      %v1871 = vpack.c.bf16 %v1841, %v1840
      %v1872 = vpack.c.bf16 %v1843, %v1842
      %v1873 = vpack.c.bf16 %v1845, %v1844
      %v1874 = vpack.c.bf16 %v1847, %v1846
      %v1875 = vpack.c.bf16 %v1849, %v1848
      %v1877 = vshrl.u32 %v1860, 16
      %v1879 = vrot.slane %v1877, 7
      %v1880 = vshll.u32 %v1860, 16
      %v1882 = vor.u32 %v1879, %v1880
      %v1884 = vshrl.u32 %v1861, 16
      %v1886 = vrot.slane %v1884, 7
      %v1887 = vshll.u32 %v1861, 16
      %v1889 = vor.u32 %v1886, %v1887
      %v1891 = vshrl.u32 %v1862, 16
      %v1893 = vrot.slane %v1891, 7
      %v1894 = vshll.u32 %v1862, 16
      %v1896 = vor.u32 %v1893, %v1894
      %v1898 = vshrl.u32 %v1863, 16
      %v1900 = vrot.slane %v1898, 7
      %v1901 = vshll.u32 %v1863, 16
      %v1903 = vor.u32 %v1900, %v1901
      %v1905 = vshrl.u32 %v1864, 16
      %v1907 = vrot.slane %v1905, 7
      %v1908 = vshll.u32 %v1864, 16
      %v1910 = vor.u32 %v1907, %v1908
      %v1912 = vshrl.u32 %v1865, 16
      %v1914 = vrot.slane %v1912, 7
      %v1915 = vshll.u32 %v1865, 16
      %v1917 = vor.u32 %v1914, %v1915
      %v1919 = vshrl.u32 %v1866, 16
      %v1921 = vrot.slane %v1919, 7
      %v1922 = vshll.u32 %v1866, 16
      %v1924 = vor.u32 %v1921, %v1922
      %v1926 = vshrl.u32 %v1867, 16
      %v1928 = vrot.slane %v1926, 7
      %v1929 = vshll.u32 %v1867, 16
      %v1931 = vor.u32 %v1928, %v1929
      %v1933 = vshrl.u32 %v1868, 16
      %v1935 = vrot.slane %v1933, 7
      %v1936 = vshll.u32 %v1868, 16
      %v1938 = vor.u32 %v1935, %v1936
      %v1940 = vshrl.u32 %v1869, 16
      %v1942 = vrot.slane %v1940, 7
      %v1943 = vshll.u32 %v1869, 16
      %v1945 = vor.u32 %v1942, %v1943
      %v1947 = vshrl.u32 %v1870, 16
      %v1949 = vrot.slane %v1947, 7
      %v1950 = vshll.u32 %v1870, 16
      %v1952 = vor.u32 %v1949, %v1950
      %v1954 = vshrl.u32 %v1871, 16
      %v1956 = vrot.slane %v1954, 7
      %v1957 = vshll.u32 %v1871, 16
      %v1959 = vor.u32 %v1956, %v1957
      %v1961 = vshrl.u32 %v1872, 16
      %v1963 = vrot.slane %v1961, 7
      %v1964 = vshll.u32 %v1872, 16
      %v1966 = vor.u32 %v1963, %v1964
      %v1968 = vshrl.u32 %v1873, 16
      %v1970 = vrot.slane %v1968, 7
      %v1971 = vshll.u32 %v1873, 16
      %v1973 = vor.u32 %v1970, %v1971
      %v1975 = vshrl.u32 %v1874, 16
      %v1977 = vrot.slane %v1975, 7
      %v1978 = vshll.u32 %v1874, 16
      %v1980 = vor.u32 %v1977, %v1978
      %v1982 = vshrl.u32 %v1875, 16
      %v1984 = vrot.slane %v1982, 7
      %v1985 = vshll.u32 %v1875, 16
      %v1987 = vor.u32 %v1984, %v1985
      %v2020 = vsel %vm688, 0, %v1882
      %v2021 = vsel %vm688, 0, %v1889
      %v2022 = vsel %vm688, 0, %v1896
      %v2023 = vsel %vm688, 0, %v1903
      %v2024 = vsel %vm688, 0, %v1910
      %v2025 = vsel %vm688, 0, %v1917
      %v2026 = vsel %vm688, 0, %v1924
      %v2027 = vsel %vm688, 0, %v1931
      %v2028 = vsel %vm688, 0, %v1938
      %v2029 = vsel %vm688, 0, %v1945
      %v2030 = vsel %vm688, 0, %v1952
      %v2031 = vsel %vm688, 0, %v1959
      %v2032 = vsel %vm688, 0, %v1966
      %v2033 = vsel %vm688, 0, %v1973
      %v2034 = vsel %vm688, 0, %v1980
      %v2035 = vsel %vm688, 0, %v1987
      %v2036 = vsel %vm688, %v1879, 0
      %v2037 = vsel %vm688, %v1886, 0
      %v2038 = vsel %vm688, %v1893, 0
      %v2039 = vsel %vm688, %v1900, 0
      %v2040 = vsel %vm688, %v1907, 0
      %v2041 = vsel %vm688, %v1914, 0
      %v2042 = vsel %vm688, %v1921, 0
      %v2043 = vsel %vm688, %v1928, 0
      %v2044 = vsel %vm688, %v1935, 0
      %v2045 = vsel %vm688, %v1942, 0
      %v2046 = vsel %vm688, %v1949, 0
      %v2047 = vsel %vm688, %v1956, 0
      %v2048 = vsel %vm688, %v1963, 0
      %v2049 = vsel %vm688, %v1970, 0
      %v2050 = vsel %vm688, %v1977, 0
      %v2051 = vsel %vm688, %v1984, 0
      %v2053 = vshrl.u32 %v2020, 16
      %v2055 = vshll.u32 %v2020, 16
      %v2057 = vrot.slane %v2055, 1
      %v2058 = vor.u32 %v2053, %v2057
      %v2060 = vshll.u32 %v2036, 16
      %v2062 = vrot.slane %v2060, 1
      %v2063 = vsel %vm723, %v2058, %v2062
      %v2065 = vshrl.u32 %v2021, 16
      %v2067 = vshll.u32 %v2021, 16
      %v2069 = vrot.slane %v2067, 1
      %v2070 = vor.u32 %v2065, %v2069
      %v2072 = vshll.u32 %v2037, 16
      %v2074 = vrot.slane %v2072, 1
      %v2075 = vsel %vm723, %v2070, %v2074
      %v2077 = vshrl.u32 %v2022, 16
      %v2079 = vshll.u32 %v2022, 16
      %v2081 = vrot.slane %v2079, 1
      %v2082 = vor.u32 %v2077, %v2081
      %v2084 = vshll.u32 %v2038, 16
      %v2086 = vrot.slane %v2084, 1
      %v2087 = vsel %vm723, %v2082, %v2086
      %v2089 = vshrl.u32 %v2023, 16
      %v2091 = vshll.u32 %v2023, 16
      %v2093 = vrot.slane %v2091, 1
      %v2094 = vor.u32 %v2089, %v2093
      %v2096 = vshll.u32 %v2039, 16
      %v2098 = vrot.slane %v2096, 1
      %v2099 = vsel %vm723, %v2094, %v2098
      %v2101 = vshrl.u32 %v2024, 16
      %v2103 = vshll.u32 %v2024, 16
      %v2105 = vrot.slane %v2103, 1
      %v2106 = vor.u32 %v2101, %v2105
      %v2108 = vshll.u32 %v2040, 16
      %v2110 = vrot.slane %v2108, 1
      %v2111 = vsel %vm723, %v2106, %v2110
      %v2113 = vshrl.u32 %v2025, 16
      %v2115 = vshll.u32 %v2025, 16
      %v2117 = vrot.slane %v2115, 1
      %v2118 = vor.u32 %v2113, %v2117
      %v2120 = vshll.u32 %v2041, 16
      %v2122 = vrot.slane %v2120, 1
      %v2123 = vsel %vm723, %v2118, %v2122
      %v2125 = vshrl.u32 %v2026, 16
      %v2127 = vshll.u32 %v2026, 16
      %v2129 = vrot.slane %v2127, 1
      %v2130 = vor.u32 %v2125, %v2129
      %v2132 = vshll.u32 %v2042, 16
      %v2134 = vrot.slane %v2132, 1
      %v2135 = vsel %vm723, %v2130, %v2134
      %v2137 = vshrl.u32 %v2027, 16
      %v2139 = vshll.u32 %v2027, 16
      %v2141 = vrot.slane %v2139, 1
      %v2142 = vor.u32 %v2137, %v2141
      %v2144 = vshll.u32 %v2043, 16
      %v2146 = vrot.slane %v2144, 1
      %v2147 = vsel %vm723, %v2142, %v2146
      %v2149 = vshrl.u32 %v2028, 16
      %v2151 = vshll.u32 %v2028, 16
      %v2153 = vrot.slane %v2151, 1
      %v2154 = vor.u32 %v2149, %v2153
      %v2156 = vshll.u32 %v2044, 16
      %v2158 = vrot.slane %v2156, 1
      %v2159 = vsel %vm723, %v2154, %v2158
      %v2161 = vshrl.u32 %v2029, 16
      %v2163 = vshll.u32 %v2029, 16
      %v2165 = vrot.slane %v2163, 1
      %v2166 = vor.u32 %v2161, %v2165
      %v2168 = vshll.u32 %v2045, 16
      %v2170 = vrot.slane %v2168, 1
      %v2171 = vsel %vm723, %v2166, %v2170
      %v2173 = vshrl.u32 %v2030, 16
      %v2175 = vshll.u32 %v2030, 16
      %v2177 = vrot.slane %v2175, 1
      %v2178 = vor.u32 %v2173, %v2177
      %v2180 = vshll.u32 %v2046, 16
      %v2182 = vrot.slane %v2180, 1
      %v2183 = vsel %vm723, %v2178, %v2182
      %v2185 = vshrl.u32 %v2031, 16
      %v2187 = vshll.u32 %v2031, 16
      %v2189 = vrot.slane %v2187, 1
      %v2190 = vor.u32 %v2185, %v2189
      %v2192 = vshll.u32 %v2047, 16
      %v2194 = vrot.slane %v2192, 1
      %v2195 = vsel %vm723, %v2190, %v2194
      %v2197 = vshrl.u32 %v2032, 16
      %v2199 = vshll.u32 %v2032, 16
      %v2201 = vrot.slane %v2199, 1
      %v2202 = vor.u32 %v2197, %v2201
      %v2204 = vshll.u32 %v2048, 16
      %v2206 = vrot.slane %v2204, 1
      %v2207 = vsel %vm723, %v2202, %v2206
      %v2209 = vshrl.u32 %v2033, 16
      %v2211 = vshll.u32 %v2033, 16
      %v2213 = vrot.slane %v2211, 1
      %v2214 = vor.u32 %v2209, %v2213
      %v2216 = vshll.u32 %v2049, 16
      %v2218 = vrot.slane %v2216, 1
      %v2219 = vsel %vm723, %v2214, %v2218
      %v2221 = vshrl.u32 %v2034, 16
      %v2223 = vshll.u32 %v2034, 16
      %v2225 = vrot.slane %v2223, 1
      %v2226 = vor.u32 %v2221, %v2225
      %v2228 = vshll.u32 %v2050, 16
      %v2230 = vrot.slane %v2228, 1
      %v2231 = vsel %vm723, %v2226, %v2230
      %v2262 = vrot.slane %v2020, 1
      %v2263 = vrot.slane %v2036, 1
      %v2264 = vsel %vm948, %v2262, %v2263
      %v2265 = vrot.slane %v2021, 1
      %v2266 = vrot.slane %v2037, 1
      %v2267 = vsel %vm948, %v2265, %v2266
      %v2268 = vrot.slane %v2022, 1
      %v2269 = vrot.slane %v2038, 1
      %v2270 = vsel %vm948, %v2268, %v2269
      %v2271 = vrot.slane %v2023, 1
      %v2272 = vrot.slane %v2039, 1
      %v2273 = vsel %vm948, %v2271, %v2272
      %v2274 = vrot.slane %v2024, 1
      %v2275 = vrot.slane %v2040, 1
      %v2276 = vsel %vm948, %v2274, %v2275
      %v2277 = vrot.slane %v2025, 1
      %v2278 = vrot.slane %v2041, 1
      %v2279 = vsel %vm948, %v2277, %v2278
      %v2280 = vrot.slane %v2026, 1
      %v2281 = vrot.slane %v2042, 1
      %v2282 = vsel %vm948, %v2280, %v2281
      %v2283 = vrot.slane %v2027, 1
      %v2284 = vrot.slane %v2043, 1
      %v2285 = vsel %vm948, %v2283, %v2284
      %v2286 = vrot.slane %v2028, 1
      %v2287 = vrot.slane %v2044, 1
      %v2288 = vsel %vm948, %v2286, %v2287
      %v2289 = vrot.slane %v2029, 1
      %v2290 = vrot.slane %v2045, 1
      %v2291 = vsel %vm948, %v2289, %v2290
      %v2292 = vrot.slane %v2030, 1
      %v2293 = vrot.slane %v2046, 1
      %v2294 = vsel %vm948, %v2292, %v2293
      %v2295 = vrot.slane %v2031, 1
      %v2296 = vrot.slane %v2047, 1
      %v2297 = vsel %vm948, %v2295, %v2296
      %v2298 = vrot.slane %v2032, 1
      %v2299 = vrot.slane %v2048, 1
      %v2300 = vsel %vm948, %v2298, %v2299
      %v2301 = vrot.slane %v2033, 1
      %v2302 = vrot.slane %v2049, 1
      %v2303 = vsel %vm948, %v2301, %v2302
      %v2304 = vrot.slane %v2034, 1
      %v2305 = vrot.slane %v2050, 1
      %v2306 = vsel %vm948, %v2304, %v2305
      %v2308 = vshrl.u32 %v2035, 16
      %v2310 = vshll.u32 %v2035, 16
      %v2312 = vrot.slane %v2310, 1
      %v2313 = vor.u32 %v2308, %v2312
      %v2315 = vshll.u32 %v2051, 16
      %v2317 = vrot.slane %v2315, 1
      %v2318 = vsel %vm723, %v2313, %v2317
      %v2321 = vrot.slane %v2035, 1
      %v2322 = vrot.slane %v2051, 1
      %v2323 = vsel %vm948, %v2321, %v2322
      %2324 = vrot.lane.b32.xlu0 %v735, 8
      %v2325 = vpop.permute.xlu0 %2324
      %2326 = vrot.lane.b32.xlu0 %v2063, 8
      %v2327 = vpop.permute.xlu0 %2326
      %2328 = vrot.lane.b32.xlu0 %v2075, 8
      %v2329 = vpop.permute.xlu0 %2328
      %2330 = vrot.lane.b32.xlu0 %v2087, 8
      %v2331 = vpop.permute.xlu0 %2330
      %2332 = vrot.lane.b32.xlu0 %v2099, 8
      %v2333 = vpop.permute.xlu0 %2332
      %2334 = vrot.lane.b32.xlu0 %v2111, 8
      %v2335 = vpop.permute.xlu0 %2334
      %2336 = vrot.lane.b32.xlu0 %v2123, 8
      %v2337 = vpop.permute.xlu0 %2336
      %2338 = vrot.lane.b32.xlu0 %v2135, 8
      %v2339 = vpop.permute.xlu0 %2338
      %2340 = vrot.lane.b32.xlu0 %v2147, 8
      %v2341 = vpop.permute.xlu0 %2340
      %2342 = vrot.lane.b32.xlu0 %v2159, 8
      %v2343 = vpop.permute.xlu0 %2342
      %2344 = vrot.lane.b32.xlu0 %v2171, 8
      %v2345 = vpop.permute.xlu0 %2344
      %2346 = vrot.lane.b32.xlu0 %v2183, 8
      %v2347 = vpop.permute.xlu0 %2346
      %2348 = vrot.lane.b32.xlu0 %v2195, 8
      %v2349 = vpop.permute.xlu0 %2348
      %2350 = vrot.lane.b32.xlu0 %v2207, 8
      %v2351 = vpop.permute.xlu0 %2350
      %2352 = vrot.lane.b32.xlu0 %v2219, 8
      %v2353 = vpop.permute.xlu0 %2352
      %2354 = vrot.lane.b32.xlu0 %v2231, 8
      %v2355 = vpop.permute.xlu0 %2354
      %2356 = vrot.lane.b32.xlu0 %v951, 16
      %v2357 = vpop.permute.xlu0 %2356
      %2358 = vrot.lane.b32.xlu0 %v2264, 16
      %v2359 = vpop.permute.xlu0 %2358
      %2360 = vrot.lane.b32.xlu0 %v2267, 16
      %v2361 = vpop.permute.xlu0 %2360
      %2362 = vrot.lane.b32.xlu0 %v2270, 16
      %v2363 = vpop.permute.xlu0 %2362
      %2364 = vrot.lane.b32.xlu0 %v2273, 16
      %v2365 = vpop.permute.xlu0 %2364
      %2366 = vrot.lane.b32.xlu0 %v2276, 16
      %v2367 = vpop.permute.xlu0 %2366
      %2368 = vrot.lane.b32.xlu0 %v2279, 16
      %v2369 = vpop.permute.xlu0 %2368
      %2370 = vrot.lane.b32.xlu0 %v2282, 16
      %v2371 = vpop.permute.xlu0 %2370
      %2372 = vrot.lane.b32.xlu0 %v2285, 16
      %v2373 = vpop.permute.xlu0 %2372
      %2374 = vrot.lane.b32.xlu0 %v2288, 16
      %v2375 = vpop.permute.xlu0 %2374
      %2376 = vrot.lane.b32.xlu0 %v2291, 16
      %v2377 = vpop.permute.xlu0 %2376
      %2378 = vrot.lane.b32.xlu0 %v2294, 16
      %v2379 = vpop.permute.xlu0 %2378
      %2380 = vrot.lane.b32.xlu0 %v2297, 16
      %v2381 = vpop.permute.xlu0 %2380
      %2382 = vrot.lane.b32.xlu0 %v2300, 16
      %v2383 = vpop.permute.xlu0 %2382
      %2384 = vrot.lane.b32.xlu0 %v2303, 16
      %v2385 = vpop.permute.xlu0 %2384
      %2386 = vrot.lane.b32.xlu0 %v2306, 16
      %v2387 = vpop.permute.xlu0 %2386
      %2388 = vrot.lane.b32.xlu0 %v2020, 24
      %v2389 = vpop.permute.xlu0 %2388
      %2390 = vrot.lane.b32.xlu0 %v2021, 24
      %v2391 = vpop.permute.xlu0 %2390
      %2392 = vrot.lane.b32.xlu0 %v2022, 24
      %v2393 = vpop.permute.xlu0 %2392
      %2394 = vrot.lane.b32.xlu0 %v2023, 24
      %v2395 = vpop.permute.xlu0 %2394
      %2396 = vrot.lane.b32.xlu0 %v2024, 24
      %v2397 = vpop.permute.xlu0 %2396
      %2398 = vrot.lane.b32.xlu0 %v2025, 24
      %v2399 = vpop.permute.xlu0 %2398
      %2400 = vrot.lane.b32.xlu0 %v2026, 24
      %v2401 = vpop.permute.xlu0 %2400
      %2402 = vrot.lane.b32.xlu0 %v2027, 24
      %v2403 = vpop.permute.xlu0 %2402
      %2404 = vrot.lane.b32.xlu0 %v2028, 24
      %v2405 = vpop.permute.xlu0 %2404
      %2406 = vrot.lane.b32.xlu0 %v2029, 24
      %v2407 = vpop.permute.xlu0 %2406
      %2408 = vrot.lane.b32.xlu0 %v2030, 24
      %v2409 = vpop.permute.xlu0 %2408
      %2410 = vrot.lane.b32.xlu0 %v2031, 24
      %v2411 = vpop.permute.xlu0 %2410
      %2412 = vrot.lane.b32.xlu0 %v2032, 24
      %v2413 = vpop.permute.xlu0 %2412
      %2414 = vrot.lane.b32.xlu0 %v2033, 24
      %v2415 = vpop.permute.xlu0 %2414
      %2416 = vrot.lane.b32.xlu0 %v2034, 24
      %v2417 = vpop.permute.xlu0 %2416
      %2418 = vrot.lane.b32.xlu0 %v2035, 24
      %v2419 = vpop.permute.xlu0 %2418
      %2420 = vrot.lane.b32.xlu0 %v2063, 32
      %v2421 = vpop.permute.xlu0 %2420
      %2422 = vrot.lane.b32.xlu0 %v2075, 32
      %v2423 = vpop.permute.xlu0 %2422
      %2424 = vrot.lane.b32.xlu0 %v2087, 32
      %v2425 = vpop.permute.xlu0 %2424
      %2426 = vrot.lane.b32.xlu0 %v2099, 32
      %v2427 = vpop.permute.xlu0 %2426
      %2428 = vrot.lane.b32.xlu0 %v2111, 32
      %v2429 = vpop.permute.xlu0 %2428
      %2430 = vrot.lane.b32.xlu0 %v2123, 32
      %v2431 = vpop.permute.xlu0 %2430
      %2432 = vrot.lane.b32.xlu0 %v2135, 32
      %v2433 = vpop.permute.xlu0 %2432
      %2434 = vrot.lane.b32.xlu0 %v2147, 32
      %v2435 = vpop.permute.xlu0 %2434
      %2436 = vrot.lane.b32.xlu0 %v2159, 32
      %v2437 = vpop.permute.xlu0 %2436
      %2438 = vrot.lane.b32.xlu0 %v2171, 32
      %v2439 = vpop.permute.xlu0 %2438
      %2440 = vrot.lane.b32.xlu0 %v2183, 32
      %v2441 = vpop.permute.xlu0 %2440
      %2442 = vrot.lane.b32.xlu0 %v2195, 32
      %v2443 = vpop.permute.xlu0 %2442
      %2444 = vrot.lane.b32.xlu0 %v2207, 32
      %v2445 = vpop.permute.xlu0 %2444
      %2446 = vrot.lane.b32.xlu0 %v2219, 32
      %v2447 = vpop.permute.xlu0 %2446
      %2448 = vrot.lane.b32.xlu0 %v2231, 32
      %v2449 = vpop.permute.xlu0 %2448
      %2450 = vrot.lane.b32.xlu0 %v2318, 32
      %v2451 = vpop.permute.xlu0 %2450
      %2452 = vrot.lane.b32.xlu0 %v2264, 40
      %v2453 = vpop.permute.xlu0 %2452
      %2454 = vrot.lane.b32.xlu0 %v2267, 40
      %v2455 = vpop.permute.xlu0 %2454
      %2456 = vrot.lane.b32.xlu0 %v2270, 40
      %v2457 = vpop.permute.xlu0 %2456
      %2458 = vrot.lane.b32.xlu0 %v2273, 40
      %v2459 = vpop.permute.xlu0 %2458
      %2460 = vrot.lane.b32.xlu0 %v2276, 40
      %v2461 = vpop.permute.xlu0 %2460
      %2462 = vrot.lane.b32.xlu0 %v2279, 40
      %v2463 = vpop.permute.xlu0 %2462
      %2464 = vrot.lane.b32.xlu0 %v2282, 40
      %v2465 = vpop.permute.xlu0 %2464
      %2466 = vrot.lane.b32.xlu0 %v2285, 40
      %v2467 = vpop.permute.xlu0 %2466
      %2468 = vrot.lane.b32.xlu0 %v2288, 40
      %v2469 = vpop.permute.xlu0 %2468
      %2470 = vrot.lane.b32.xlu0 %v2291, 40
      %v2471 = vpop.permute.xlu0 %2470
      %2472 = vrot.lane.b32.xlu0 %v2294, 40
      %v2473 = vpop.permute.xlu0 %2472
      %2474 = vrot.lane.b32.xlu0 %v2297, 40
      %v2475 = vpop.permute.xlu0 %2474
      %2476 = vrot.lane.b32.xlu0 %v2300, 40
      %v2477 = vpop.permute.xlu0 %2476
      %2478 = vrot.lane.b32.xlu0 %v2303, 40
      %v2479 = vpop.permute.xlu0 %2478
      %2480 = vrot.lane.b32.xlu0 %v2306, 40
      %v2481 = vpop.permute.xlu0 %2480
      %2482 = vrot.lane.b32.xlu0 %v2323, 40
      %v2483 = vpop.permute.xlu0 %2482
      %2484 = vrot.lane.b32.xlu0 %v2021, 48
      %v2485 = vpop.permute.xlu0 %2484
      %2486 = vrot.lane.b32.xlu0 %v2022, 48
      %v2487 = vpop.permute.xlu0 %2486
      %2488 = vrot.lane.b32.xlu0 %v2023, 48
      %v2489 = vpop.permute.xlu0 %2488
      %2490 = vrot.lane.b32.xlu0 %v2024, 48
      %v2491 = vpop.permute.xlu0 %2490
      %2492 = vrot.lane.b32.xlu0 %v2025, 48
      %v2493 = vpop.permute.xlu0 %2492
      %2494 = vrot.lane.b32.xlu0 %v2026, 48
      %v2495 = vpop.permute.xlu0 %2494
      %2496 = vrot.lane.b32.xlu0 %v2027, 48
      %v2497 = vpop.permute.xlu0 %2496
      %2498 = vrot.lane.b32.xlu0 %v2028, 48
      %v2499 = vpop.permute.xlu0 %2498
      %2500 = vrot.lane.b32.xlu0 %v2029, 48
      %v2501 = vpop.permute.xlu0 %2500
      %2502 = vrot.lane.b32.xlu0 %v2030, 48
      %v2503 = vpop.permute.xlu0 %2502
      %2504 = vrot.lane.b32.xlu0 %v2031, 48
      %v2505 = vpop.permute.xlu0 %2504
      %2506 = vrot.lane.b32.xlu0 %v2032, 48
      %v2507 = vpop.permute.xlu0 %2506
      %2508 = vrot.lane.b32.xlu0 %v2033, 48
      %v2509 = vpop.permute.xlu0 %2508
      %2510 = vrot.lane.b32.xlu0 %v2034, 48
      %v2511 = vpop.permute.xlu0 %2510
      %2512 = vrot.lane.b32.xlu0 %v2035, 48
      %v2513 = vpop.permute.xlu0 %2512
      %2514 = vrot.lane.b32.xlu0 %v689, 48
      %v2515 = vpop.permute.xlu0 %2514
      %2516 = vrot.lane.b32.xlu0 %v2075, 56
      %v2517 = vpop.permute.xlu0 %2516
      %2518 = vrot.lane.b32.xlu0 %v2087, 56
      %v2519 = vpop.permute.xlu0 %2518
      %2520 = vrot.lane.b32.xlu0 %v2099, 56
      %v2521 = vpop.permute.xlu0 %2520
      %2522 = vrot.lane.b32.xlu0 %v2111, 56
      %v2523 = vpop.permute.xlu0 %2522
      %2524 = vrot.lane.b32.xlu0 %v2123, 56
      %v2525 = vpop.permute.xlu0 %2524
      %2526 = vrot.lane.b32.xlu0 %v2135, 56
      %v2527 = vpop.permute.xlu0 %2526
      %2528 = vrot.lane.b32.xlu0 %v2147, 56
      %v2529 = vpop.permute.xlu0 %2528
      %2530 = vrot.lane.b32.xlu0 %v2159, 56
      %v2531 = vpop.permute.xlu0 %2530
      %2532 = vrot.lane.b32.xlu0 %v2171, 56
      %v2533 = vpop.permute.xlu0 %2532
      %2534 = vrot.lane.b32.xlu0 %v2183, 56
      %v2535 = vpop.permute.xlu0 %2534
      %2536 = vrot.lane.b32.xlu0 %v2195, 56
      %v2537 = vpop.permute.xlu0 %2536
      %2538 = vrot.lane.b32.xlu0 %v2207, 56
      %v2539 = vpop.permute.xlu0 %2538
      %2540 = vrot.lane.b32.xlu0 %v2219, 56
      %v2541 = vpop.permute.xlu0 %2540
      %2542 = vrot.lane.b32.xlu0 %v2231, 56
      %v2543 = vpop.permute.xlu0 %2542
      %2544 = vrot.lane.b32.xlu0 %v2318, 56
      %v2545 = vpop.permute.xlu0 %2544
      %2546 = vrot.lane.b32.xlu0 %v735, 56
      %v2547 = vpop.permute.xlu0 %2546
      %2548 = vrot.lane.b32.xlu0 %v2267, 64
      %v2549 = vpop.permute.xlu0 %2548
      %2550 = vrot.lane.b32.xlu0 %v2270, 64
      %v2551 = vpop.permute.xlu0 %2550
      %2552 = vrot.lane.b32.xlu0 %v2273, 64
      %v2553 = vpop.permute.xlu0 %2552
      %2554 = vrot.lane.b32.xlu0 %v2276, 64
      %v2555 = vpop.permute.xlu0 %2554
      %2556 = vrot.lane.b32.xlu0 %v2279, 64
      %v2557 = vpop.permute.xlu0 %2556
      %2558 = vrot.lane.b32.xlu0 %v2282, 64
      %v2559 = vpop.permute.xlu0 %2558
      %2560 = vrot.lane.b32.xlu0 %v2285, 64
      %v2561 = vpop.permute.xlu0 %2560
      %2562 = vrot.lane.b32.xlu0 %v2288, 64
      %v2563 = vpop.permute.xlu0 %2562
      %2564 = vrot.lane.b32.xlu0 %v2291, 64
      %v2565 = vpop.permute.xlu0 %2564
      %2566 = vrot.lane.b32.xlu0 %v2294, 64
      %v2567 = vpop.permute.xlu0 %2566
      %2568 = vrot.lane.b32.xlu0 %v2297, 64
      %v2569 = vpop.permute.xlu0 %2568
      %2570 = vrot.lane.b32.xlu0 %v2300, 64
      %v2571 = vpop.permute.xlu0 %2570
      %2572 = vrot.lane.b32.xlu0 %v2303, 64
      %v2573 = vpop.permute.xlu0 %2572
      %2574 = vrot.lane.b32.xlu0 %v2306, 64
      %v2575 = vpop.permute.xlu0 %2574
      %2576 = vrot.lane.b32.xlu0 %v2323, 64
      %v2577 = vpop.permute.xlu0 %2576
      %2578 = vrot.lane.b32.xlu0 %v951, 64
      %v2579 = vpop.permute.xlu0 %2578
      %v2581 = vsel %vm465, %v689, %v2325
      %v2583 = vsel %vm465, %v2020, %v2327
      %v2585 = vsel %vm465, %v2021, %v2329
      %v2587 = vsel %vm465, %v2022, %v2331
      %v2589 = vsel %vm465, %v2023, %v2333
      %v2591 = vsel %vm465, %v2024, %v2335
      %v2593 = vsel %vm465, %v2025, %v2337
      %v2595 = vsel %vm465, %v2026, %v2339
      %v2597 = vsel %vm465, %v2027, %v2341
      %v2599 = vsel %vm465, %v2028, %v2343
      %v2601 = vsel %vm465, %v2029, %v2345
      %v2603 = vsel %vm465, %v2030, %v2347
      %v2605 = vsel %vm465, %v2031, %v2349
      %v2607 = vsel %vm465, %v2032, %v2351
      %v2609 = vsel %vm465, %v2033, %v2353
      %v2611 = vsel %vm465, %v2034, %v2355
      %v2613 = vsel %vm1238, %v2581, %v2357
      %v2615 = vsel %vm1238, %v2583, %v2359
      %v2617 = vsel %vm1238, %v2585, %v2361
      %v2619 = vsel %vm1238, %v2587, %v2363
      %v2621 = vsel %vm1238, %v2589, %v2365
      %v2623 = vsel %vm1238, %v2591, %v2367
      %v2625 = vsel %vm1238, %v2593, %v2369
      %v2627 = vsel %vm1238, %v2595, %v2371
      %v2629 = vsel %vm1238, %v2597, %v2373
      %v2631 = vsel %vm1238, %v2599, %v2375
      %v2633 = vsel %vm1238, %v2601, %v2377
      %v2635 = vsel %vm1238, %v2603, %v2379
      %v2637 = vsel %vm1238, %v2605, %v2381
      %v2639 = vsel %vm1238, %v2607, %v2383
      %v2641 = vsel %vm1238, %v2609, %v2385
      %v2643 = vsel %vm1238, %v2611, %v2387
      %vm2644 = vcmask 195584
      %v2646 = vsel %vm2644, %v2613, %v2389
      %v2648 = vsel %vm2644, %v2615, %v2391
      %v2650 = vsel %vm2644, %v2617, %v2393
      %v2652 = vsel %vm2644, %v2619, %v2395
      %v2654 = vsel %vm2644, %v2621, %v2397
      %v2656 = vsel %vm2644, %v2623, %v2399
      %v2658 = vsel %vm2644, %v2625, %v2401
      %v2660 = vsel %vm2644, %v2627, %v2403
      %v2662 = vsel %vm2644, %v2629, %v2405
      %v2664 = vsel %vm2644, %v2631, %v2407
      %v2666 = vsel %vm2644, %v2633, %v2409
      %v2668 = vsel %vm2644, %v2635, %v2411
      %v2670 = vsel %vm2644, %v2637, %v2413
      %v2672 = vsel %vm2644, %v2639, %v2415
      %v2674 = vsel %vm2644, %v2641, %v2417
      %v2676 = vsel %vm2644, %v2643, %v2419
      %v2678 = vsel %vm1271, %v2646, %v2421
      %v2680 = vsel %vm1271, %v2648, %v2423
      %v2682 = vsel %vm1271, %v2650, %v2425
      %v2684 = vsel %vm1271, %v2652, %v2427
      %v2686 = vsel %vm1271, %v2654, %v2429
      %v2688 = vsel %vm1271, %v2656, %v2431
      %v2690 = vsel %vm1271, %v2658, %v2433
      %v2692 = vsel %vm1271, %v2660, %v2435
      %v2694 = vsel %vm1271, %v2662, %v2437
      %v2696 = vsel %vm1271, %v2664, %v2439
      %v2698 = vsel %vm1271, %v2666, %v2441
      %v2700 = vsel %vm1271, %v2668, %v2443
      %v2702 = vsel %vm1271, %v2670, %v2445
      %v2704 = vsel %vm1271, %v2672, %v2447
      %v2706 = vsel %vm1271, %v2674, %v2449
      %v2708 = vsel %vm1271, %v2676, %v2451
      %vm2709 = vcmask 326656
      %v2711 = vsel %vm2709, %v2678, %v2453
      %v2713 = vsel %vm2709, %v2680, %v2455
      %v2715 = vsel %vm2709, %v2682, %v2457
      %v2717 = vsel %vm2709, %v2684, %v2459
      %v2719 = vsel %vm2709, %v2686, %v2461
      %v2721 = vsel %vm2709, %v2688, %v2463
      %v2723 = vsel %vm2709, %v2690, %v2465
      %v2725 = vsel %vm2709, %v2692, %v2467
      %v2727 = vsel %vm2709, %v2694, %v2469
      %v2729 = vsel %vm2709, %v2696, %v2471
      %v2731 = vsel %vm2709, %v2698, %v2473
      %v2733 = vsel %vm2709, %v2700, %v2475
      %v2735 = vsel %vm2709, %v2702, %v2477
      %v2737 = vsel %vm2709, %v2704, %v2479
      %v2739 = vsel %vm2709, %v2706, %v2481
      %v2741 = vsel %vm2709, %v2708, %v2483
      %v2743 = vsel %vm1304, %v2711, %v2485
      %v2745 = vsel %vm1304, %v2713, %v2487
      %v2747 = vsel %vm1304, %v2715, %v2489
      %v2749 = vsel %vm1304, %v2717, %v2491
      %v2751 = vsel %vm1304, %v2719, %v2493
      %v2753 = vsel %vm1304, %v2721, %v2495
      %v2755 = vsel %vm1304, %v2723, %v2497
      %v2757 = vsel %vm1304, %v2725, %v2499
      %v2759 = vsel %vm1304, %v2727, %v2501
      %v2761 = vsel %vm1304, %v2729, %v2503
      %v2763 = vsel %vm1304, %v2731, %v2505
      %v2765 = vsel %vm1304, %v2733, %v2507
      %v2767 = vsel %vm1304, %v2735, %v2509
      %v2769 = vsel %vm1304, %v2737, %v2511
      %v2771 = vsel %vm1304, %v2739, %v2513
      %v2773 = vsel %vm1304, %v2741, %v2515
      %vm2774 = vcmask 457728
      %v2776 = vsel %vm2774, %v2743, %v2517
      %v2778 = vsel %vm2774, %v2745, %v2519
      %v2780 = vsel %vm2774, %v2747, %v2521
      %v2782 = vsel %vm2774, %v2749, %v2523
      %v2784 = vsel %vm2774, %v2751, %v2525
      %v2786 = vsel %vm2774, %v2753, %v2527
      %v2788 = vsel %vm2774, %v2755, %v2529
      %v2790 = vsel %vm2774, %v2757, %v2531
      %v2792 = vsel %vm2774, %v2759, %v2533
      %v2794 = vsel %vm2774, %v2761, %v2535
      %v2796 = vsel %vm2774, %v2763, %v2537
      %v2798 = vsel %vm2774, %v2765, %v2539
      %v2800 = vsel %vm2774, %v2767, %v2541
      %v2802 = vsel %vm2774, %v2769, %v2543
      %v2804 = vsel %vm2774, %v2771, %v2545
      %v2806 = vsel %vm2774, %v2773, %v2547
      %v2808 = vsel %vm1337, %v2776, %v2549
      %v2810 = vsel %vm1337, %v2778, %v2551
      %v2812 = vsel %vm1337, %v2780, %v2553
      %v2814 = vsel %vm1337, %v2782, %v2555
      %v2816 = vsel %vm1337, %v2784, %v2557
      %v2818 = vsel %vm1337, %v2786, %v2559
      %v2820 = vsel %vm1337, %v2788, %v2561
      %v2822 = vsel %vm1337, %v2790, %v2563
      %v2824 = vsel %vm1337, %v2792, %v2565
      %v2826 = vsel %vm1337, %v2794, %v2567
      %v2828 = vsel %vm1337, %v2796, %v2569
      %v2830 = vsel %vm1337, %v2798, %v2571
      %v2832 = vsel %vm1337, %v2800, %v2573
      %v2834 = vsel %vm1337, %v2802, %v2575
      %v2836 = vsel %vm1337, %v2804, %v2577
      %v2838 = vsel %vm1337, %v2806, %v2579
      %v2840 = vlaneseq
      %v2841 = vshrl.u32 %v2840, 7
      %v2842 = vsub.s32 0, %v2841
      %v2843 = vrot.slane %v1859, %v2842
      %v2854 = vunpack.c.l.b16 %v1850
      %v2855 = vunpack.c.l.b16 %v1851
      %v2856 = vunpack.c.l.b16 %v1852
      %v2857 = vunpack.c.l.b16 %v1853
      %v2858 = vunpack.c.l.b16 %v1854
      %v2859 = vunpack.c.l.b16 %v1855
      %v2860 = vunpack.c.l.b16 %v1856
      %v2861 = vunpack.c.l.b16 %v1857
      %v2862 = vunpack.c.l.b16 %v1858
      %v2863 = vpack.c.b16 %v2855, %v2854
      %v2864 = vpack.c.b16 %v2857, %v2856
      %v2865 = vpack.c.b16 %v2859, %v2858
      %v2866 = vpack.c.b16 %v2861, %v2860
      %v2867 = vpack.c.b16 %v2862, %v2862
      %vm2872 = vcmask 588800
      %v2873 = vsel %vm2872, %v2808, 0
      %v2875 = vsel %vm2872, %v2810, 0
      %v2877 = vsel %vm2872, %v2812, 0
      %v2879 = vsel %vm2872, %v2814, 0
      %v2881 = vsel %vm2872, %v2816, 0
      %v2883 = vsel %vm2872, %v2818, 0
      %v2885 = vsel %vm2872, %v2820, 0
      %v2887 = vsel %vm2872, %v2822, 0
      %v2889 = vsel %vm2872, %v2824, 0
      %v2891 = vsel %vm2872, %v2826, 0
      %v2893 = vsel %vm2872, %v2828, 0
      %v2895 = vsel %vm2872, %v2830, 0
      %v2897 = vsel %vm2872, %v2832, 0
      %v2899 = vsel %vm2872, %v2834, 0
      %v2901 = vsel %vm2872, %v2836, 0
      %v2903 = vsel %vm2872, %v2838, 0
      %vm2905 = vcmask 1043456
      %v2907 = vsel %vm2905, %v2867, 0
      %2909 = vmatprep.subr.bf16.mxu0 0
      %2910 = vmatpush1.bf16.msra.mxu0 %v2863
      %2911 = vmatprep.subr.bf16.mxu0 0
      %2912 = vmatpush1.bf16.msra.mxu0 %v2864
      %2913 = vmatprep.subr.bf16.mxu0 0
      %2914 = vmatpush1.bf16.msra.mxu0 %v2865
      %2915 = vmatprep.subr.bf16.mxu0 0
      %2916 = vmatpush1.bf16.msra.mxu0 %v2866
      %2917 = vmatprep.subr.bf16.mxu0 0
      %2918 = vmatpush1.bf16.msra.mxu0 %v2907
      %2919 = vmatprep.subr.bf16.mxu0 0
      %2920 = vmatpush1.bf16.msra.mxu0 0
      %2921 = vmatprep.subr.bf16.mxu0 0
      %2922 = vmatpush1.bf16.msra.mxu0 0
      %2923 = vmatprep.subr.bf16.mxu0 0
      %2924 = vmatpush1.bf16.msra.mxu0 0
      %2925 = vmatprep.subr.bf16.mxu0 0
      %2926 = vmatpush1.bf16.msra.mxu0 0
      %2927 = vmatprep.subr.bf16.mxu0 0
      %2928 = vmatpush1.bf16.msra.mxu0 0
      %2929 = vmatprep.subr.bf16.mxu0 0
      %2930 = vmatpush1.bf16.msra.mxu0 0
      %2931 = vmatprep.subr.bf16.mxu0 0
      %2932 = vmatpush1.bf16.msra.mxu0 0
      %2933 = vmatprep.subr.bf16.mxu0 0
      %2934 = vmatpush1.bf16.msra.mxu0 0
      %2935 = vmatprep.subr.bf16.mxu0 0
      %2936 = vmatpush1.bf16.msra.mxu0 0
      %2937 = vmatprep.subr.bf16.mxu0 0
      %2938 = vmatpush1.bf16.msra.mxu0 0
      %2939 = vmatprep.subr.bf16.mxu0 0
      %2940 = vmatpush1.bf16.msra.mxu0 0
      %2941 = vmatprep.mubr.bf16.mxu0 0
      %2942 = vmatmul.mubr.bf16.gmra.mrb[0].mxu0 %v2873
      %v2943 = vpop.f32.mrb[0].mxu0
      %v2944 = vadd.f32 %v2843, %v2943
      %v2945 = vpop.f32.mrb[0].mxu0
      %v2946 = vpop.f32.mrb[0].mxu0
      %v2947 = vadd.f32 %v2843, %v2946
      %v2948 = vpop.f32.mrb[0].mxu0
      %2949 = vmatprep.mubr.bf16.mxu0 0
      %2950 = vmatmul.mubr.bf16.gmra.mrb[0].mxu0 %v2875
      %v2951 = vpop.f32.mrb[0].mxu0
      %v2952 = vadd.f32 %v2843, %v2951
      %v2953 = vpop.f32.mrb[0].mxu0
      %v2954 = vpop.f32.mrb[0].mxu0
      %v2955 = vadd.f32 %v2843, %v2954
      %v2956 = vpop.f32.mrb[0].mxu0
      %2957 = vmatprep.mubr.bf16.mxu0 0
      %2958 = vmatmul.mubr.bf16.gmra.mrb[0].mxu0 %v2877
      %v2959 = vpop.f32.mrb[0].mxu0
      %v2960 = vadd.f32 %v2843, %v2959
      %v2961 = vpop.f32.mrb[0].mxu0
      %v2962 = vpop.f32.mrb[0].mxu0
      %v2963 = vadd.f32 %v2843, %v2962
      %v2964 = vpop.f32.mrb[0].mxu0
      %2965 = vmatprep.mubr.bf16.mxu0 0
      %2966 = vmatmul.mubr.bf16.gmra.mrb[0].mxu0 %v2879
      %v2967 = vpop.f32.mrb[0].mxu0
      %v2968 = vadd.f32 %v2843, %v2967
      %v2969 = vpop.f32.mrb[0].mxu0
      %v2970 = vpop.f32.mrb[0].mxu0
      %v2971 = vadd.f32 %v2843, %v2970
      %v2972 = vpop.f32.mrb[0].mxu0
      %2973 = vmatprep.mubr.bf16.mxu0 0
      %2974 = vmatmul.mubr.bf16.gmra.mrb[0].mxu0 %v2881
      %v2975 = vpop.f32.mrb[0].mxu0
      %v2976 = vadd.f32 %v2843, %v2975
      %v2977 = vpop.f32.mrb[0].mxu0
      %v2978 = vpop.f32.mrb[0].mxu0
      %v2979 = vadd.f32 %v2843, %v2978
      %v2980 = vpop.f32.mrb[0].mxu0
      %2981 = vmatprep.mubr.bf16.mxu0 0
      %2982 = vmatmul.mubr.bf16.gmra.mrb[0].mxu0 %v2883
      %v2983 = vpop.f32.mrb[0].mxu0
      %v2984 = vadd.f32 %v2843, %v2983
      %v2985 = vpop.f32.mrb[0].mxu0
      %v2986 = vpop.f32.mrb[0].mxu0
      %v2987 = vadd.f32 %v2843, %v2986
      %v2988 = vpop.f32.mrb[0].mxu0
      %2989 = vmatprep.mubr.bf16.mxu0 0
      %2990 = vmatmul.mubr.bf16.gmra.mrb[0].mxu0 %v2885
      %v2991 = vpop.f32.mrb[0].mxu0
      %v2992 = vadd.f32 %v2843, %v2991
      %v2993 = vpop.f32.mrb[0].mxu0
      %v2994 = vpop.f32.mrb[0].mxu0
      %v2995 = vadd.f32 %v2843, %v2994
      %v2996 = vpop.f32.mrb[0].mxu0
      %2997 = vmatprep.mubr.bf16.mxu0 0
      %2998 = vmatmul.mubr.bf16.gmra.mrb[0].mxu0 %v2887
      %v2999 = vpop.f32.mrb[0].mxu0
      %v3000 = vadd.f32 %v2843, %v2999
      %v3001 = vpop.f32.mrb[0].mxu0
      %v3002 = vpop.f32.mrb[0].mxu0
      %v3003 = vadd.f32 %v2843, %v3002
      %v3004 = vpop.f32.mrb[0].mxu0
      %3005 = vmatprep.mubr.bf16.mxu0 0
      %3006 = vmatmul.mubr.bf16.gmra.mrb[0].mxu0 %v2889
      %v3007 = vpop.f32.mrb[0].mxu0
      %v3008 = vadd.f32 %v2843, %v3007
      %v3009 = vpop.f32.mrb[0].mxu0
      %v3010 = vpop.f32.mrb[0].mxu0
      %v3011 = vadd.f32 %v2843, %v3010
      %v3012 = vpop.f32.mrb[0].mxu0
      %3013 = vmatprep.mubr.bf16.mxu0 0
      %3014 = vmatmul.mubr.bf16.gmra.mrb[0].mxu0 %v2891
      %v3015 = vpop.f32.mrb[0].mxu0
      %v3016 = vadd.f32 %v2843, %v3015
      %v3017 = vpop.f32.mrb[0].mxu0
      %v3018 = vpop.f32.mrb[0].mxu0
      %v3019 = vadd.f32 %v2843, %v3018
      %v3020 = vpop.f32.mrb[0].mxu0
      %3021 = vmatprep.mubr.bf16.mxu0 0
      %3022 = vmatmul.mubr.bf16.gmra.mrb[0].mxu0 %v2893
      %v3023 = vpop.f32.mrb[0].mxu0
      %v3024 = vadd.f32 %v2843, %v3023
      %v3025 = vpop.f32.mrb[0].mxu0
      %v3026 = vpop.f32.mrb[0].mxu0
      %v3027 = vadd.f32 %v2843, %v3026
      %v3028 = vpop.f32.mrb[0].mxu0
      %3029 = vmatprep.mubr.bf16.mxu0 0
      %3030 = vmatmul.mubr.bf16.gmra.mrb[0].mxu0 %v2895
      %v3031 = vpop.f32.mrb[0].mxu0
      %v3032 = vadd.f32 %v2843, %v3031
      %v3033 = vpop.f32.mrb[0].mxu0
      %v3034 = vpop.f32.mrb[0].mxu0
      %v3035 = vadd.f32 %v2843, %v3034
      %v3036 = vpop.f32.mrb[0].mxu0
      %3037 = vmatprep.mubr.bf16.mxu0 0
      %3038 = vmatmul.mubr.bf16.gmra.mrb[0].mxu0 %v2897
      %v3039 = vpop.f32.mrb[0].mxu0
      %v3040 = vadd.f32 %v2843, %v3039
      %v3041 = vpop.f32.mrb[0].mxu0
      %v3042 = vpop.f32.mrb[0].mxu0
      %v3043 = vadd.f32 %v2843, %v3042
      %v3044 = vpop.f32.mrb[0].mxu0
      %3045 = vmatprep.mubr.bf16.mxu0 0
      %3046 = vmatmul.mubr.bf16.gmra.mrb[0].mxu0 %v2899
      %v3047 = vpop.f32.mrb[0].mxu0
      %v3048 = vadd.f32 %v2843, %v3047
      %v3049 = vpop.f32.mrb[0].mxu0
      %v3050 = vpop.f32.mrb[0].mxu0
      %v3051 = vadd.f32 %v2843, %v3050
      %v3052 = vpop.f32.mrb[0].mxu0
      %3053 = vmatprep.mubr.bf16.mxu0 0
      %3054 = vmatmul.mubr.bf16.gmra.mrb[0].mxu0 %v2901
      %v3055 = vpop.f32.mrb[0].mxu0
      %v3056 = vadd.f32 %v2843, %v3055
      %v3057 = vpop.f32.mrb[0].mxu0
      %v3058 = vpop.f32.mrb[0].mxu0
      %v3059 = vadd.f32 %v2843, %v3058
      %v3060 = vpop.f32.mrb[0].mxu0
      %3061 = vmatprep.mubr.bf16.mxu0 0
      %3062 = vmatmul.mubr.bf16.gmra.mrb[0].mxu0 %v2903
      %v3063 = vpop.f32.mrb[0].mxu0
      %v3064 = vadd.f32 %v2843, %v3063
      %v3065 = vpop.f32.mrb[0].mxu0
      %v3066 = vpop.f32.mrb[0].mxu0
      %v3067 = vadd.f32 %v2843, %v3066
      %v3068 = vpop.f32.mrb[0].mxu0
      %3069 = vdwg.mxu0
      %v3070 = vadd.f32 %v305, %v2944
      %v3071 = vadd.f32 %v306, %v2947
      %v3072 = vadd.f32 %v307, %v2952
      %v3073 = vadd.f32 %v308, %v2955
      %v3074 = vadd.f32 %v309, %v2960
      %v3075 = vadd.f32 %v310, %v2963
      %v3076 = vadd.f32 %v311, %v2968
      %v3077 = vadd.f32 %v312, %v2971
      %v3078 = vadd.f32 %v313, %v2976
      %v3079 = vadd.f32 %v314, %v2979
      %v3080 = vadd.f32 %v315, %v2984
      %v3081 = vadd.f32 %v316, %v2987
      %v3082 = vadd.f32 %v317, %v2992
      %v3083 = vadd.f32 %v318, %v2995
      %v3084 = vadd.f32 %v319, %v3000
      %v3085 = vadd.f32 %v320, %v3003
      %v3086 = vadd.f32 %v321, %v3008
      %v3087 = vadd.f32 %v322, %v3011
      %v3088 = vadd.f32 %v323, %v3016
      %v3089 = vadd.f32 %v324, %v3019
      %v3090 = vadd.f32 %v325, %v3024
      %v3091 = vadd.f32 %v326, %v3027
      %v3092 = vadd.f32 %v327, %v3032
      %v3093 = vadd.f32 %v328, %v3035
      %v3094 = vadd.f32 %v329, %v3040
      %v3095 = vadd.f32 %v330, %v3043
      %v3096 = vadd.f32 %v331, %v3048
      %v3097 = vadd.f32 %v332, %v3051
      %v3098 = vadd.f32 %v333, %v3056
      %v3099 = vadd.f32 %v334, %v3059
      %v3100 = vadd.f32 %v335, %v3064
      %v3101 = vadd.f32 %v336, %v3067
      %3102 = vst.msk [vmem:[%s271] sm:$0xff] %vm465, %v3070
      %3103 = vst.msk [vmem:[%s271 + $0x8] sm:$0xff] %vm465, %v3071
      %3104 = vst.msk [vmem:[%s271 + $0x10] sm:$0xff] %vm465, %v3072
      %3105 = vst.msk [vmem:[%s271 + $0x18] sm:$0xff] %vm465, %v3073
      %3106 = vst.msk [vmem:[%s271 + $0x20] sm:$0xff] %vm465, %v3074
      %3107 = vst.msk [vmem:[%s271 + $0x28] sm:$0xff] %vm465, %v3075
      %3108 = vst.msk [vmem:[%s271 + $0x30] sm:$0xff] %vm465, %v3076
      %3109 = vst.msk [vmem:[%s271 + $0x38] sm:$0xff] %vm465, %v3077
      %3110 = vst.msk [vmem:[%s271 + $0x40] sm:$0xff] %vm465, %v3078
      %3111 = vst.msk [vmem:[%s271 + $0x48] sm:$0xff] %vm465, %v3079
      %3112 = vst.msk [vmem:[%s271 + $0x50] sm:$0xff] %vm465, %v3080
      %3113 = vst.msk [vmem:[%s271 + $0x58] sm:$0xff] %vm465, %v3081
      %3114 = vst.msk [vmem:[%s271 + $0x60] sm:$0xff] %vm465, %v3082
      %3115 = vst.msk [vmem:[%s271 + $0x68] sm:$0xff] %vm465, %v3083
      %3116 = vst.msk [vmem:[%s271 + $0x70] sm:$0xff] %vm465, %v3084
      %3117 = vst.msk [vmem:[%s271 + $0x78] sm:$0xff] %vm465, %v3085
      %3118 = vst.msk [vmem:[%s271 + $0x80] sm:$0xff] %vm465, %v3086
      %3119 = vst.msk [vmem:[%s271 + $0x88] sm:$0xff] %vm465, %v3087
      %3120 = vst.msk [vmem:[%s271 + $0x90] sm:$0xff] %vm465, %v3088
      %3121 = vst.msk [vmem:[%s271 + $0x98] sm:$0xff] %vm465, %v3089
      %3122 = vst.msk [vmem:[%s271 + $0xa0] sm:$0xff] %vm465, %v3090
      %3123 = vst.msk [vmem:[%s271 + $0xa8] sm:$0xff] %vm465, %v3091
      %3124 = vst.msk [vmem:[%s271 + $0xb0] sm:$0xff] %vm465, %v3092
      %3125 = vst.msk [vmem:[%s271 + $0xb8] sm:$0xff] %vm465, %v3093
      %3126 = vst.msk [vmem:[%s271 + $0xc0] sm:$0xff] %vm465, %v3094
      %3127 = vst.msk [vmem:[%s271 + $0xc8] sm:$0xff] %vm465, %v3095
      %3128 = vst.msk [vmem:[%s271 + $0xd0] sm:$0xff] %vm465, %v3096
      %3129 = vst.msk [vmem:[%s271 + $0xd8] sm:$0xff] %vm465, %v3097
      %3130 = vst.msk [vmem:[%s271 + $0xe0] sm:$0xff] %vm465, %v3098
      %3131 = vst.msk [vmem:[%s271 + $0xe8] sm:$0xff] %vm465, %v3099
      %3132 = vst.msk [vmem:[%s271 + $0xf0] sm:$0xff] %vm465, %v3100
      %3133 = vst.msk [vmem:[%s271 + $0xf8] sm:$0xff] %vm465, %v3101
      %p3134 = scmp.lt.s32.totalorder %s17, 1
      %s3135 = scalar_select %p3134, %s17, 1
      %s3136 = smul.addr %s3135, 32
      %s3137 = smul.addr %s3136, 8
      %s3138 = scalar_lea.vmem %s6, %s3137
      // Predicated region
      $region45: #{tpu_custom_call.1} parent=43 // pred_check
        %p3139 = pneg %p171
      $region46: #{tpu_custom_call.1} parent=43 // pred_check_branch
        %3141 = sbr.rel (%p3139) target = $region48
      $region47: #{tpu_custom_call.1} parent=43 // pred_region
        _
      $region48: #{tpu_custom_call.1} parent=43 // pred_fallthru
        _
    $region44: #{tpu_custom_call.1} parent=5 // pred_fallthru
      _
    %p3142 = scmp.le.s32.totalorder 2, %s12
    // Predicated region
    $region49: #{tpu_custom_call.1} parent=5 // pred_check
      %p3143 = pneg %p3142
    $region50: #{tpu_custom_call.1} parent=5 // pred_check_branch
      %3145 = sbr.rel (%p3143) target = $region52
    $region51: #{tpu_custom_call.1} parent=5 // pred_region
      %s3146 = ssub.s32 %s12, 2
      // Predicated region
      $region53: #{tpu_custom_call.1} parent=51 // pred_check
        %p3147 = pneg %p177
      $region54: #{tpu_custom_call.1} parent=51 // pred_check_branch
        %3149 = sbr.rel (%p3147) target = $region56
      $region55: #{tpu_custom_call.1} parent=51 // pred_region
        %p3150 = scmp.lt.s32.totalorder %s18, 1
        %s3151 = scalar_select %p3150, %s18, 1
        %s3152 = smul.addr %s3151, 32
        %s3153 = smul.addr %s3152, 8
        %s3154 = scalar_lea.vmem %s6, %s3153
      $region56: #{tpu_custom_call.1} parent=51 // pred_fallthru
        _
    $region52: #{tpu_custom_call.1} parent=5 // pred_fallthru
      _
  $region6: #{tpu_custom_call.1} parent=0 // loop_footer
    %s16 = sadd.s32 1, %s12
  $region7: #{tpu_custom_call.1} parent=0 // loop_footer_branch
    %11 = sbr.rel target = $region3
  $region8: #{tpu_custom_call.1} parent=0 // loop_exit
    _

</llo_original>
